<compile_context>
chip_gen: v7x
topology: tpu7x:2x2x1
jax: 0.10.0
libtpu: 0.0.40
codegen_flags: <defaults>
</compile_context>

<pallas_src>
import jax
import jax.numpy as jnp
from jax.experimental import pallas as pl
from jax.experimental.pallas import tpu as pltpu

LANE = 128     # TPU lane width (last dim)
SUBLANE = 8    # f32 sublane count (second-to-last dim)
_MIB = 1 << 20


def _round_up(x, m):
    return (x + m - 1) // m * m


def _cdiv(a, b):
    return (a + b - 1) // b


def _vmem_capacity_bytes():
    """Per-TensorCore VMEM capacity; portability floor is v7x's 64 MiB."""
    try:
        return int(pltpu.get_tpu_info().vmem_capacity_bytes)
    except Exception:
        return 64 * _MIB


# --------------------------------------------------------------------------
# Kernels
# --------------------------------------------------------------------------
def _encoder_fused_kernel(x_ref, *rest):
    """One batch tile through the whole encoder, all weights VMEM-resident.

    h <- relu(h @ W_i + b_i) for every layer. bf16 operands feed the MXU,
    accumulation stays f32. Zero padding is exact: padded input cols meet
    zero weight rows; padded output cols get zero weight+bias so ReLU keeps
    them 0 (no leakage into real columns; padding sliced off by the wrapper).
    """
    *wb_refs, o_ref = rest
    n_layers = len(wb_refs) // 2
    h = x_ref[...].astype(jnp.bfloat16)                    # [tile_b, Din_p]
    for i in range(n_layers):                              # static layer loop
        w = wb_refs[2 * i][...]                            # bf16 [Din_p, Dout_p]
        b = wb_refs[2 * i + 1][...]                        # f32  [1, Dout_p]
        acc = jnp.dot(h, w, preferred_element_type=jnp.float32) + b
        acc = jnp.maximum(acc, 0.0)                        # ReLU on every layer
        h = acc if i == n_layers - 1 else acc.astype(jnp.bfloat16)
    o_ref[...] = h.astype(o_ref.dtype)


def _linear_relu_kernel(x_ref, w_ref, b_ref, o_ref, acc_ref):
    """K/N-tiled Linear+ReLU for the large-weight fallback path."""
    @pl.when(pl.program_id(2) == 0)
    def _():
        acc_ref[...] = jnp.zeros_like(acc_ref)

    acc_ref[...] += jnp.dot(x_ref[...].astype(jnp.bfloat16), w_ref[...],
                            preferred_element_type=jnp.float32)

    @pl.when(pl.program_id(2) == pl.num_programs(2) - 1)
    def _():
        o_ref[...] = jnp.maximum(acc_ref[...] + b_ref[...], 0.0).astype(o_ref.dtype)


# --------------------------------------------------------------------------
# Parameters
# --------------------------------------------------------------------------
def init_encoder_params(key, input_dim, latent_dim, hidden_dim, n_layers):
    """PyTorch nn.Linear-style init (uniform +-1/sqrt(fan_in)).
    Weights stored already transposed: [in, out] so the kernel does x @ W."""
    n_hidden = n_layers - 2
    dims = [input_dim] + [hidden_dim] * (n_hidden + 1) + [latent_dim]
    params = []
    for i in range(len(dims) - 1):
        key, wk, bk = jax.random.split(key, 3)
        bound = 1.0 / (dims[i] ** 0.5)
        w = jax.random.uniform(wk, (dims[i], dims[i + 1]),
                               minval=-bound, maxval=bound, dtype=jnp.float32)
        b = jax.random.uniform(bk, (dims[i + 1],),
                               minval=-bound, maxval=bound, dtype=jnp.float32)
        params.append((w, b))
    return params


def pad_params(params):
    """Zero-pad weights/biases to lane-dense (multiple-of-128) feature dims.
    Weights cast to bf16 (MXU-native operand dtype, half the DMA/VMEM);
    biases stay f32 (added to the f32 accumulator)."""
    padded = []
    for w, b in params:
        din, dout = w.shape
        din_p, dout_p = _round_up(din, LANE), _round_up(dout, LANE)
        w_p = (jnp.zeros((din_p, dout_p), jnp.float32)
               .at[:din, :dout].set(w).astype(jnp.bfloat16))
        b_p = jnp.zeros((1, dout_p), jnp.float32).at[0, :dout].set(b)
        padded.append((w_p, b_p))
    return padded


# --------------------------------------------------------------------------
# pallas_call wrappers
# --------------------------------------------------------------------------
def _fused_call(x_p, wb_flat, tile_b, dout_p, out_dtype, vmem_limit,
                single_buffer_weights):
    b_pad, din_p = x_p.shape
    in_specs = [pl.BlockSpec((tile_b, din_p), lambda i: (i, 0))]
    for arr in wb_flat:
        kwargs = {}
        if single_buffer_weights:
            # Constant block index -> DMA'd once, resident across the grid.
            # Buffered(1) drops the useless second buffer (halves weight VMEM).
            kwargs["pipeline_mode"] = pl.Buffered(1)
        in_specs.append(pl.BlockSpec(arr.shape, lambda i: (0, 0), **kwargs))
    return pl.pallas_call(
        _encoder_fused_kernel,
        out_shape=jax.ShapeDtypeStruct((b_pad, dout_p), out_dtype),
        grid=(_cdiv(b_pad, tile_b),),
        in_specs=in_specs,
        out_specs=pl.BlockSpec((tile_b, dout_p), lambda i: (i, 0)),
        compiler_params=pltpu.CompilerParams(
            dimension_semantics=("parallel",),     # shard batch tiles across TCs
            vmem_limit_bytes=vmem_limit,
        ),
    )(x_p, *wb_flat)


def _linear_relu_tiled(x_p, w_p, b_p, *, tm, tn, tk, vmem_limit):
    B, K = x_p.shape
    _, N = w_p.shape
    return pl.pallas_call(
        _linear_relu_kernel,
        out_shape=jax.ShapeDtypeStruct((B, N), jnp.float32),
        grid=(_cdiv(B, tm), _cdiv(N, tn), _cdiv(K, tk)),
        in_specs=[
            pl.BlockSpec((tm, tk), lambda i, j, k: (i, k)),
            pl.BlockSpec((tk, tn), lambda i, j, k: (k, j)),
            pl.BlockSpec((1, tn), lambda i, j, k: (0, j)),
        ],
        out_specs=pl.BlockSpec((tm, tn), lambda i, j, k: (i, j)),
        scratch_shapes=[pltpu.VMEM((tm, tn), jnp.float32)],
        compiler_params=pltpu.CompilerParams(
            dimension_semantics=("parallel", "parallel", "arbitrary"),
            vmem_limit_bytes=vmem_limit,
        ),
    )(x_p, w_p, b_p)


def encoder_forward(padded_params, x, out_dim, *, max_tile_b=256,
                    out_dtype=jnp.float32, force_tiled=False):
    """Encoder forward. Default: one fused pallas_call with VMEM-resident
    weights. Falls back to per-layer K/N-tiled matmuls when the resident
    footprint would exceed ~70% of per-core VMEM (e.g. big hidden_dim on v7x).
    """
    B, din = x.shape
    din_p = padded_params[0][0].shape[0]
    dout_p = padded_params[-1][0].shape[1]

    # Batch tiling: sublane-align only (no rounding up to a full tile -> no
    # dead rows); aim for >= 2 grid steps so v7x's second TensorCore is used.
    b_pad = _round_up(max(B, SUBLANE), SUBLANE)
    half = _round_up(_cdiv(b_pad, 2), SUBLANE)
    tile_b = max(SUBLANE, min(max_tile_b, half))

    x_p = jnp.zeros((b_pad, din_p), jnp.float32).at[:B, :din].set(x)

    # VMEM accounting (per-TensorCore budget: 64 MiB v7x, 128 MiB v5e/v6e).
    cap = _vmem_capacity_bytes()
    w_bytes = sum(int(w.size) * w.dtype.itemsize + int(b.size) * b.dtype.itemsize
                  for w, b in padded_params)
    max_feat = max([din_p] + [w.shape[1] for w, _ in padded_params])
    act_bytes = tile_b * (din_p + dout_p) * 4 * 2      # double-buffered x / out tiles
    inter_bytes = tile_b * max_feat * 4 * 3            # f32 intermediate + bf16 copy + slack
    resident_bytes = w_bytes + act_bytes + inter_bytes

    if force_tiled or resident_bytes > 0.7 * cap:
        # Weights too large to keep resident: per-layer tiled matmuls with an
        # f32 accumulator; activations round-trip HBM between layers.
        vmem_limit = int(min(cap, 48 * _MIB))
        h = x_p
        for w_p, b_p in padded_params:
            K, N = w_p.shape
            tm = min(256, b_pad)
            tn = min(512, N)
            tk = min(512, K)
            h = _linear_relu_tiled(h, w_p, b_p, tm=tm, tn=tn, tk=tk,
                                   vmem_limit=vmem_limit)
        out_p = h.astype(out_dtype)
    else:
        wb_flat = [a for wb in padded_params for a in wb]
        # Size the scoped-VMEM limit for the worst case (weights double-buffered
        # if the single-buffer hint is unavailable), with headroom.
        vmem_limit = int(min(cap, max(2 * w_bytes + act_bytes + inter_bytes
                                      + 8 * _MIB, 32 * _MIB)))
        try:
            out_p = _fused_call(x_p, wb_flat, tile_b, dout_p, out_dtype,
                                vmem_limit, single_buffer_weights=True)
        except Exception:
            # pipeline_mode=pl.Buffered(1) unsupported on this JAX version:
            # fall back to default (double-buffered) resident weights.
            out_p = _fused_call(x_p, wb_flat, tile_b, dout_p, out_dtype,
                                vmem_limit, single_buffer_weights=False)

    return out_p[:B, :out_dim]


def encoder_ref(params, x):
    """Pure-JAX f32 reference (unpadded)."""
    for w, b in params:
        x = jnp.maximum(x @ w + b, 0.0)
    return x


if __name__ == "__main__":
    # Small shapes consistent with Encoder(input_dim, latent_dim, hidden_dim, n_layers)
    input_dim, latent_dim, hidden_dim, n_layers = 64, 16, 32, 4
    batch = 8

    key = jax.random.PRNGKey(0)
    pkey, xkey = jax.random.split(key)
    params = init_encoder_params(pkey, input_dim, latent_dim, hidden_dim, n_layers)
    padded_params = pad_params(params)
    x = jax.random.normal(xkey, (batch, input_dim), dtype=jnp.float32)

    ref = encoder_ref(params, x)

    # Fused, VMEM-resident path (default for small encoders).
    out = jax.block_until_ready(encoder_forward(padded_params, x, latent_dim))
    assert out.shape == (batch, latent_dim)
    # bf16 MXU operands with f32 accumulation -> loosened tolerance vs f32 ref.
    assert jnp.allclose(out, ref, atol=3e-2, rtol=3e-2)

    # Also exercise the K/N-tiled fallback (used when weights exceed ~0.7*VMEM).
    out_tiled = jax.block_until_ready(
        encoder_forward(padded_params, x, latent_dim, force_tiled=True))
    assert out_tiled.shape == (batch, latent_dim)
    assert jnp.allclose(out_tiled, ref, atol=3e-2, rtol=3e-2)

    print("KERNEL_OK")
</pallas_src>

<mosaic_0001>
module attributes {stable_mosaic.version = 11 : i64} {
  func.func @_encoder_fused_kernel(%arg0: i32, %arg1: memref<8x128xf32, #tpu.memory_space<vmem>>, %arg2: memref<128x128xbf16, #tpu.memory_space<vmem>>, %arg3: memref<1x128xf32, #tpu.memory_space<vmem>>, %arg4: memref<128x128xbf16, #tpu.memory_space<vmem>>, %arg5: memref<1x128xf32, #tpu.memory_space<vmem>>, %arg6: memref<128x128xbf16, #tpu.memory_space<vmem>>, %arg7: memref<1x128xf32, #tpu.memory_space<vmem>>, %arg8: memref<128x128xbf16, #tpu.memory_space<vmem>>, %arg9: memref<1x128xf32, #tpu.memory_space<vmem>>, %arg10: memref<8x128xf32, #tpu.memory_space<vmem>>) attributes {dimension_semantics = [#tpu.dimension_semantics<parallel>], iteration_bounds = array<i64: 1>, scalar_prefetch = 0 : i64, scratch_operands = 0 : i64, tpu.core_type = #tpu.core_type<tc>, window_params = [{transform_indices = @transform_0, window_bounds = array<i64: 8, 128>}, {pipeline_mode = #tpu.pipeline_mode<synchronous>, transform_indices = @transform_1, window_bounds = array<i64: 128, 128>}, {pipeline_mode = #tpu.pipeline_mode<synchronous>, transform_indices = @transform_2, window_bounds = array<i64: 1, 128>}, {pipeline_mode = #tpu.pipeline_mode<synchronous>, transform_indices = @transform_3, window_bounds = array<i64: 128, 128>}, {pipeline_mode = #tpu.pipeline_mode<synchronous>, transform_indices = @transform_4, window_bounds = array<i64: 1, 128>}, {pipeline_mode = #tpu.pipeline_mode<synchronous>, transform_indices = @transform_5, window_bounds = array<i64: 128, 128>}, {pipeline_mode = #tpu.pipeline_mode<synchronous>, transform_indices = @transform_6, window_bounds = array<i64: 1, 128>}, {pipeline_mode = #tpu.pipeline_mode<synchronous>, transform_indices = @transform_7, window_bounds = array<i64: 128, 128>}, {pipeline_mode = #tpu.pipeline_mode<synchronous>, transform_indices = @transform_8, window_bounds = array<i64: 1, 128>}, {transform_indices = @transform_9, window_bounds = array<i64: 8, 128>}]} {
    %c0 = arith.constant 0 : index
    %c0_0 = arith.constant 0 : index
    %0 = vector.load %arg1[%c0, %c0_0] : memref<8x128xf32, #tpu.memory_space<vmem>>, vector<8x128xf32>
    %1 = arith.truncf %0 : vector<8x128xf32> to vector<8x128xbf16>
    %c0_1 = arith.constant 0 : index
    %c0_2 = arith.constant 0 : index
    %2 = vector.load %arg2[%c0_1, %c0_2] : memref<128x128xbf16, #tpu.memory_space<vmem>>, vector<128x128xbf16>
    %c0_3 = arith.constant 0 : index
    %c0_4 = arith.constant 0 : index
    %3 = vector.load %arg3[%c0_3, %c0_4] : memref<1x128xf32, #tpu.memory_space<vmem>>, vector<1x128xf32>
    %cst = arith.constant dense<0.000000e+00> : vector<8x128xf32>
    %4 = tpu.matmul %1, %2, %cst {dimension_numbers = #tpu.dot_dimension_numbers<[1], [0], [0], [1], [0, 0, 1, 1], [], []>} : vector<8x128xbf16>, vector<128x128xbf16>, vector<8x128xf32> -> vector<8x128xf32>
    %5 = vector.broadcast %3 : vector<1x128xf32> to vector<8x128xf32>
    %6 = arith.addf %4, %5 : vector<8x128xf32>
    %cst_5 = arith.constant 0.000000e+00 : f32
    %7 = vector.broadcast %cst_5 : f32 to vector<8x128xf32>
    %8 = arith.maximumf %6, %7 : vector<8x128xf32>
    %9 = arith.truncf %8 : vector<8x128xf32> to vector<8x128xbf16>
    %c0_6 = arith.constant 0 : index
    %c0_7 = arith.constant 0 : index
    %10 = vector.load %arg4[%c0_6, %c0_7] : memref<128x128xbf16, #tpu.memory_space<vmem>>, vector<128x128xbf16>
    %c0_8 = arith.constant 0 : index
    %c0_9 = arith.constant 0 : index
    %11 = vector.load %arg5[%c0_8, %c0_9] : memref<1x128xf32, #tpu.memory_space<vmem>>, vector<1x128xf32>
    %cst_10 = arith.constant dense<0.000000e+00> : vector<8x128xf32>
    %12 = tpu.matmul %9, %10, %cst_10 {dimension_numbers = #tpu.dot_dimension_numbers<[1], [0], [0], [1], [0, 0, 1, 1], [], []>} : vector<8x128xbf16>, vector<128x128xbf16>, vector<8x128xf32> -> vector<8x128xf32>
    %13 = vector.broadcast %11 : vector<1x128xf32> to vector<8x128xf32>
    %14 = arith.addf %12, %13 : vector<8x128xf32>
    %cst_11 = arith.constant 0.000000e+00 : f32
    %15 = vector.broadcast %cst_11 : f32 to vector<8x128xf32>
    %16 = arith.maximumf %14, %15 : vector<8x128xf32>
    %17 = arith.truncf %16 : vector<8x128xf32> to vector<8x128xbf16>
    %c0_12 = arith.constant 0 : index
    %c0_13 = arith.constant 0 : index
    %18 = vector.load %arg6[%c0_12, %c0_13] : memref<128x128xbf16, #tpu.memory_space<vmem>>, vector<128x128xbf16>
    %c0_14 = arith.constant 0 : index
    %c0_15 = arith.constant 0 : index
    %19 = vector.load %arg7[%c0_14, %c0_15] : memref<1x128xf32, #tpu.memory_space<vmem>>, vector<1x128xf32>
    %cst_16 = arith.constant dense<0.000000e+00> : vector<8x128xf32>
    %20 = tpu.matmul %17, %18, %cst_16 {dimension_numbers = #tpu.dot_dimension_numbers<[1], [0], [0], [1], [0, 0, 1, 1], [], []>} : vector<8x128xbf16>, vector<128x128xbf16>, vector<8x128xf32> -> vector<8x128xf32>
    %21 = vector.broadcast %19 : vector<1x128xf32> to vector<8x128xf32>
    %22 = arith.addf %20, %21 : vector<8x128xf32>
    %cst_17 = arith.constant 0.000000e+00 : f32
    %23 = vector.broadcast %cst_17 : f32 to vector<8x128xf32>
    %24 = arith.maximumf %22, %23 : vector<8x128xf32>
    %25 = arith.truncf %24 : vector<8x128xf32> to vector<8x128xbf16>
    %c0_18 = arith.constant 0 : index
    %c0_19 = arith.constant 0 : index
    %26 = vector.load %arg8[%c0_18, %c0_19] : memref<128x128xbf16, #tpu.memory_space<vmem>>, vector<128x128xbf16>
    %c0_20 = arith.constant 0 : index
    %c0_21 = arith.constant 0 : index
    %27 = vector.load %arg9[%c0_20, %c0_21] : memref<1x128xf32, #tpu.memory_space<vmem>>, vector<1x128xf32>
    %cst_22 = arith.constant dense<0.000000e+00> : vector<8x128xf32>
    %28 = tpu.matmul %25, %26, %cst_22 {dimension_numbers = #tpu.dot_dimension_numbers<[1], [0], [0], [1], [0, 0, 1, 1], [], []>} : vector<8x128xbf16>, vector<128x128xbf16>, vector<8x128xf32> -> vector<8x128xf32>
    %29 = vector.broadcast %27 : vector<1x128xf32> to vector<8x128xf32>
    %30 = arith.addf %28, %29 : vector<8x128xf32>
    %cst_23 = arith.constant 0.000000e+00 : f32
    %31 = vector.broadcast %cst_23 : f32 to vector<8x128xf32>
    %32 = arith.maximumf %30, %31 : vector<8x128xf32>
    %c0_24 = arith.constant 0 : index
    %c0_25 = arith.constant 0 : index
    %33 = vector.load %arg10[%c0_24, %c0_25] : memref<8x128xf32, #tpu.memory_space<vmem>>, vector<8x128xf32>
    tpu.vector_store %arg10[%c0_24, %c0_25], %32 {strides = array<i32>} : memref<8x128xf32, #tpu.memory_space<vmem>>, vector<8x128xf32>,
    return
  }
  func.func @transform_0(%arg0: i32) -> (i32, i32) {
    %c0_i32 = arith.constant 0 : i32
    %c0_i32_0 = arith.constant 0 : i32
    return %arg0, %c0_i32 : i32, i32
  }
  func.func @transform_1(%arg0: i32) -> (i32, i32) {
    %c0_i32 = arith.constant 0 : i32
    %c0_i32_0 = arith.constant 0 : i32
    %c0_i32_1 = arith.constant 0 : i32
    return %c0_i32, %c0_i32_0 : i32, i32
  }
  func.func @transform_2(%arg0: i32) -> (i32, i32) {
    %c0_i32 = arith.constant 0 : i32
    %c0_i32_0 = arith.constant 0 : i32
    %c0_i32_1 = arith.constant 0 : i32
    return %c0_i32, %c0_i32_0 : i32, i32
  }
  func.func @transform_3(%arg0: i32) -> (i32, i32) {
    %c0_i32 = arith.constant 0 : i32
    %c0_i32_0 = arith.constant 0 : i32
    %c0_i32_1 = arith.constant 0 : i32
    return %c0_i32, %c0_i32_0 : i32, i32
  }
  func.func @transform_4(%arg0: i32) -> (i32, i32) {
    %c0_i32 = arith.constant 0 : i32
    %c0_i32_0 = arith.constant 0 : i32
    %c0_i32_1 = arith.constant 0 : i32
    return %c0_i32, %c0_i32_0 : i32, i32
  }
  func.func @transform_5(%arg0: i32) -> (i32, i32) {
    %c0_i32 = arith.constant 0 : i32
    %c0_i32_0 = arith.constant 0 : i32
    %c0_i32_1 = arith.constant 0 : i32
    return %c0_i32, %c0_i32_0 : i32, i32
  }
  func.func @transform_6(%arg0: i32) -> (i32, i32) {
    %c0_i32 = arith.constant 0 : i32
    %c0_i32_0 = arith.constant 0 : i32
    %c0_i32_1 = arith.constant 0 : i32
    return %c0_i32, %c0_i32_0 : i32, i32
  }
  func.func @transform_7(%arg0: i32) -> (i32, i32) {
    %c0_i32 = arith.constant 0 : i32
    %c0_i32_0 = arith.constant 0 : i32
    %c0_i32_1 = arith.constant 0 : i32
    return %c0_i32, %c0_i32_0 : i32, i32
  }
  func.func @transform_8(%arg0: i32) -> (i32, i32) {
    %c0_i32 = arith.constant 0 : i32
    %c0_i32_0 = arith.constant 0 : i32
    %c0_i32_1 = arith.constant 0 : i32
    return %c0_i32, %c0_i32_0 : i32, i32
  }
  func.func @transform_9(%arg0: i32) -> (i32, i32) {
    %c0_i32 = arith.constant 0 : i32
    %c0_i32_0 = arith.constant 0 : i32
    return %arg0, %c0_i32 : i32, i32
  }
}

module attributes {stable_mosaic.version = 11 : i64} {
  func.func @_encoder_fused_kernel(%arg0: i32, %arg1: memref<8x128xf32, #tpu.memory_space<vmem>>, %arg2: memref<128x128xbf16, #tpu.memory_space<vmem>>, %arg3: memref<1x128xf32, #tpu.memory_space<vmem>>, %arg4: memref<128x128xbf16, #tpu.memory_space<vmem>>, %arg5: memref<1x128xf32, #tpu.memory_space<vmem>>, %arg6: memref<128x128xbf16, #tpu.memory_space<vmem>>, %arg7: memref<1x128xf32, #tpu.memory_space<vmem>>, %arg8: memref<128x128xbf16, #tpu.memory_space<vmem>>, %arg9: memref<1x128xf32, #tpu.memory_space<vmem>>, %arg10: memref<8x128xf32, #tpu.memory_space<vmem>>) attributes {dimension_semantics = [#tpu.dimension_semantics<parallel>], iteration_bounds = array<i64: 1>, scalar_prefetch = 0 : i64, scratch_operands = 0 : i64, tpu.core_type = #tpu.core_type<tc>, window_params = [{transform_indices = @transform_0, window_bounds = array<i64: 8, 128>}, {pipeline_mode = #tpu.pipeline_mode<synchronous>, transform_indices = @transform_1, window_bounds = array<i64: 128, 128>}, {pipeline_mode = #tpu.pipeline_mode<synchronous>, transform_indices = @transform_2, window_bounds = array<i64: 1, 128>}, {pipeline_mode = #tpu.pipeline_mode<synchronous>, transform_indices = @transform_3, window_bounds = array<i64: 128, 128>}, {pipeline_mode = #tpu.pipeline_mode<synchronous>, transform_indices = @transform_4, window_bounds = array<i64: 1, 128>}, {pipeline_mode = #tpu.pipeline_mode<synchronous>, transform_indices = @transform_5, window_bounds = array<i64: 128, 128>}, {pipeline_mode = #tpu.pipeline_mode<synchronous>, transform_indices = @transform_6, window_bounds = array<i64: 1, 128>}, {pipeline_mode = #tpu.pipeline_mode<synchronous>, transform_indices = @transform_7, window_bounds = array<i64: 128, 128>}, {pipeline_mode = #tpu.pipeline_mode<synchronous>, transform_indices = @transform_8, window_bounds = array<i64: 1, 128>}, {transform_indices = @transform_9, window_bounds = array<i64: 8, 128>}]} {
    %c0 = arith.constant 0 : index
    %c0_0 = arith.constant 0 : index
    %0 = vector.load %arg1[%c0, %c0_0] : memref<8x128xf32, #tpu.memory_space<vmem>>, vector<8x128xf32>
    %1 = arith.truncf %0 : vector<8x128xf32> to vector<8x128xbf16>
    %c0_1 = arith.constant 0 : index
    %c0_2 = arith.constant 0 : index
    %2 = vector.load %arg2[%c0_1, %c0_2] : memref<128x128xbf16, #tpu.memory_space<vmem>>, vector<128x128xbf16>
    %c0_3 = arith.constant 0 : index
    %c0_4 = arith.constant 0 : index
    %3 = vector.load %arg3[%c0_3, %c0_4] : memref<1x128xf32, #tpu.memory_space<vmem>>, vector<1x128xf32>
    %cst = arith.constant dense<0.000000e+00> : vector<8x128xf32>
    %4 = tpu.matmul %1, %2, %cst {dimension_numbers = #tpu.dot_dimension_numbers<[1], [0], [0], [1], [0, 0, 1, 1], [], []>} : vector<8x128xbf16>, vector<128x128xbf16>, vector<8x128xf32> -> vector<8x128xf32>
    %5 = vector.broadcast %3 : vector<1x128xf32> to vector<8x128xf32>
    %6 = arith.addf %4, %5 : vector<8x128xf32>
    %cst_5 = arith.constant 0.000000e+00 : f32
    %7 = vector.broadcast %cst_5 : f32 to vector<8x128xf32>
    %8 = arith.maximumf %6, %7 : vector<8x128xf32>
    %9 = arith.truncf %8 : vector<8x128xf32> to vector<8x128xbf16>
    %c0_6 = arith.constant 0 : index
    %c0_7 = arith.constant 0 : index
    %10 = vector.load %arg4[%c0_6, %c0_7] : memref<128x128xbf16, #tpu.memory_space<vmem>>, vector<128x128xbf16>
    %c0_8 = arith.constant 0 : index
    %c0_9 = arith.constant 0 : index
    %11 = vector.load %arg5[%c0_8, %c0_9] : memref<1x128xf32, #tpu.memory_space<vmem>>, vector<1x128xf32>
    %cst_10 = arith.constant dense<0.000000e+00> : vector<8x128xf32>
    %12 = tpu.matmul %9, %10, %cst_10 {dimension_numbers = #tpu.dot_dimension_numbers<[1], [0], [0], [1], [0, 0, 1, 1], [], []>} : vector<8x128xbf16>, vector<128x128xbf16>, vector<8x128xf32> -> vector<8x128xf32>
    %13 = vector.broadcast %11 : vector<1x128xf32> to vector<8x128xf32>
    %14 = arith.addf %12, %13 : vector<8x128xf32>
    %cst_11 = arith.constant 0.000000e+00 : f32
    %15 = vector.broadcast %cst_11 : f32 to vector<8x128xf32>
    %16 = arith.maximumf %14, %15 : vector<8x128xf32>
    %17 = arith.truncf %16 : vector<8x128xf32> to vector<8x128xbf16>
    %c0_12 = arith.constant 0 : index
    %c0_13 = arith.constant 0 : index
    %18 = vector.load %arg6[%c0_12, %c0_13] : memref<128x128xbf16, #tpu.memory_space<vmem>>, vector<128x128xbf16>
    %c0_14 = arith.constant 0 : index
    %c0_15 = arith.constant 0 : index
    %19 = vector.load %arg7[%c0_14, %c0_15] : memref<1x128xf32, #tpu.memory_space<vmem>>, vector<1x128xf32>
    %cst_16 = arith.constant dense<0.000000e+00> : vector<8x128xf32>
    %20 = tpu.matmul %17, %18, %cst_16 {dimension_numbers = #tpu.dot_dimension_numbers<[1], [0], [0], [1], [0, 0, 1, 1], [], []>} : vector<8x128xbf16>, vector<128x128xbf16>, vector<8x128xf32> -> vector<8x128xf32>
    %21 = vector.broadcast %19 : vector<1x128xf32> to vector<8x128xf32>
    %22 = arith.addf %20, %21 : vector<8x128xf32>
    %cst_17 = arith.constant 0.000000e+00 : f32
    %23 = vector.broadcast %cst_17 : f32 to vector<8x128xf32>
    %24 = arith.maximumf %22, %23 : vector<8x128xf32>
    %25 = arith.truncf %24 : vector<8x128xf32> to vector<8x128xbf16>
    %c0_18 = arith.constant 0 : index
    %c0_19 = arith.constant 0 : index
    %26 = vector.load %arg8[%c0_18, %c0_19] : memref<128x128xbf16, #tpu.memory_space<vmem>>, vector<128x128xbf16>
    %c0_20 = arith.constant 0 : index
    %c0_21 = arith.constant 0 : index
    %27 = vector.load %arg9[%c0_20, %c0_21] : memref<1x128xf32, #tpu.memory_space<vmem>>, vector<1x128xf32>
    %cst_22 = arith.constant dense<0.000000e+00> : vector<8x128xf32>
    %28 = tpu.matmul %25, %26, %cst_22 {dimension_numbers = #tpu.dot_dimension_numbers<[1], [0], [0], [1], [0, 0, 1, 1], [], []>} : vector<8x128xbf16>, vector<128x128xbf16>, vector<8x128xf32> -> vector<8x128xf32>
    %29 = vector.broadcast %27 : vector<1x128xf32> to vector<8x128xf32>
    %30 = arith.addf %28, %29 : vector<8x128xf32>
    %cst_23 = arith.constant 0.000000e+00 : f32
    %31 = vector.broadcast %cst_23 : f32 to vector<8x128xf32>
    %32 = arith.maximumf %30, %31 : vector<8x128xf32>
    %c0_24 = arith.constant 0 : index
    %c0_25 = arith.constant 0 : index
    %33 = vector.load %arg10[%c0_24, %c0_25] : memref<8x128xf32, #tpu.memory_space<vmem>>, vector<8x128xf32>
    tpu.vector_store %arg10[%c0_24, %c0_25], %32 {strides = array<i32>} : memref<8x128xf32, #tpu.memory_space<vmem>>, vector<8x128xf32>,
    return
  }
  func.func @transform_0(%arg0: i32) -> (i32, i32) {
    %c0_i32 = arith.constant 0 : i32
    %c0_i32_0 = arith.constant 0 : i32
    return %arg0, %c0_i32 : i32, i32
  }
  func.func @transform_1(%arg0: i32) -> (i32, i32) {
    %c0_i32 = arith.constant 0 : i32
    %c0_i32_0 = arith.constant 0 : i32
    %c0_i32_1 = arith.constant 0 : i32
    return %c0_i32, %c0_i32_0 : i32, i32
  }
  func.func @transform_2(%arg0: i32) -> (i32, i32) {
    %c0_i32 = arith.constant 0 : i32
    %c0_i32_0 = arith.constant 0 : i32
    %c0_i32_1 = arith.constant 0 : i32
    return %c0_i32, %c0_i32_0 : i32, i32
  }
  func.func @transform_3(%arg0: i32) -> (i32, i32) {
    %c0_i32 = arith.constant 0 : i32
    %c0_i32_0 = arith.constant 0 : i32
    %c0_i32_1 = arith.constant 0 : i32
    return %c0_i32, %c0_i32_0 : i32, i32
  }
  func.func @transform_4(%arg0: i32) -> (i32, i32) {
    %c0_i32 = arith.constant 0 : i32
    %c0_i32_0 = arith.constant 0 : i32
    %c0_i32_1 = arith.constant 0 : i32
    return %c0_i32, %c0_i32_0 : i32, i32
  }
  func.func @transform_5(%arg0: i32) -> (i32, i32) {
    %c0_i32 = arith.constant 0 : i32
    %c0_i32_0 = arith.constant 0 : i32
    %c0_i32_1 = arith.constant 0 : i32
    return %c0_i32, %c0_i32_0 : i32, i32
  }
  func.func @transform_6(%arg0: i32) -> (i32, i32) {
    %c0_i32 = arith.constant 0 : i32
    %c0_i32_0 = arith.constant 0 : i32
    %c0_i32_1 = arith.constant 0 : i32
    return %c0_i32, %c0_i32_0 : i32, i32
  }
  func.func @transform_7(%arg0: i32) -> (i32, i32) {
    %c0_i32 = arith.constant 0 : i32
    %c0_i32_0 = arith.constant 0 : i32
    %c0_i32_1 = arith.constant 0 : i32
    return %c0_i32, %c0_i32_0 : i32, i32
  }
  func.func @transform_8(%arg0: i32) -> (i32, i32) {
    %c0_i32 = arith.constant 0 : i32
    %c0_i32_0 = arith.constant 0 : i32
    %c0_i32_1 = arith.constant 0 : i32
    return %c0_i32, %c0_i32_0 : i32, i32
  }
  func.func @transform_9(%arg0: i32) -> (i32, i32) {
    %c0_i32 = arith.constant 0 : i32
    %c0_i32_0 = arith.constant 0 : i32
    return %arg0, %c0_i32 : i32, i32
  }
}

</mosaic_0001>

<llo_original>
// kernel: tpu_custom_call.1
$region0: #{tpu_custom_call.1}
  #allocation0 [shape = 'u32[]', space=smem, size = 0x4, offset = 0x4, fixed_abs, tag = 'smem constant byte address 0x4 - core index']
  #allocation1 [shape = 'u32[144,128]{1,0:T(1,128)}', space=vmem, size = 0x12000, scoped, tag = 'internal scratch']
  %s0 = inlined_call_operand.hbm [shape: f32[8,128], index: 0, kind: input, shape index: {}]
  %s1 = inlined_call_operand.hbm [shape: bf16[128,128], index: 1, kind: input, shape index: {}]
  %s2 = inlined_call_operand.vmem [shape: f32[1,128], index: 2, kind: input, shape index: {}]
  %s3 = inlined_call_operand.hbm [shape: bf16[128,128], index: 3, kind: input, shape index: {}]
  %s4 = inlined_call_operand.vmem [shape: f32[1,128], index: 4, kind: input, shape index: {}]
  %s5 = inlined_call_operand.hbm [shape: bf16[128,128], index: 5, kind: input, shape index: {}]
  %s6 = inlined_call_operand.vmem [shape: f32[1,128], index: 6, kind: input, shape index: {}]
  %s7 = inlined_call_operand.hbm [shape: bf16[128,128], index: 7, kind: input, shape index: {}]
  %s8 = inlined_call_operand.vmem [shape: f32[1,128], index: 8, kind: input, shape index: {}]
  %s9 = inlined_call_operand.hbm [shape: f32[8,128], index: 9, kind: output, shape index: {}]
  %s10 = sld [smem:[#allocation0]]
  $region66: #{tpu_custom_call.1} parent=0
    _
  %s12 = ssub.s32 1, %s10
  %s13 = scalar_select 0, %s12, %s10
  $region1: #{tpu_custom_call.1} parent=0
    #allocation2 [shape = 'u8[4096]{0}', space=vmem, size = 0x1000, scoped, tag = 'input window, operand 0, single buffered']
    #allocation3 [shape = 's32[1]{0}', space=sflag, size = 0x4, scoped, tag = 'scoped memory for tpu_custom_call.1']
    #allocation4 [shape = 's32[1]{0}', space=sflag, size = 0x4, scoped, tag = 'scoped memory for tpu_custom_call.1']
    #allocation5 [shape = 'u8[32768]{0}', space=vmem, size = 0x8000, scoped, tag = 'input window, operand 1, single buffered']
    #allocation6 [shape = 's32[1]{0}', space=sflag, size = 0x4, scoped, tag = 'scoped memory for tpu_custom_call.1']
    #allocation7 [shape = 'u8[32768]{0}', space=vmem, size = 0x8000, scoped, tag = 'input window, operand 3, single buffered']
    #allocation8 [shape = 'u8[32768]{0}', space=vmem, size = 0x8000, scoped, tag = 'input window, operand 5, single buffered']
    #allocation9 [shape = 's32[1]{0}', space=sflag, size = 0x4, scoped, tag = 'scoped memory for tpu_custom_call.1']
    #allocation10 [shape = 'u8[32768]{0}', space=vmem, size = 0x8000, scoped, tag = 'input window, operand 7, single buffered']
    #allocation11 [shape = 'u8[4096]{0}', space=vmem, size = 0x1000, scoped, tag = 'output window, operand 0, single buffered']
    %14 = vsyncpa [#allocation3], 0
    %15 = vsyncpa [#allocation6], 0
    %16 = vsyncpa [#allocation9], 0
    %17 = vsyncpa [#allocation4], 0
    // Predicated region
    $region2: #{tpu_custom_call.1} parent=1 // pred_check
      _
    $region3: #{tpu_custom_call.1} parent=1 // pred_check_branch
      %19 = sbr.rel (0) target = $region5
    $region4: #{tpu_custom_call.1} parent=1 // pred_region
      %s21 = ssub.s32 128, 128
      %22 = vsyncadd [#allocation3], %s21
      %s24 = sshll.u32 [#allocation2], 4
      %s25 = int_to_ptr.vmem [resolvable:$true] %s24
      %27 = dma.hbm_to_vmem [thread:$0]  %s0, 128, %s25, [#allocation3]
    $region5: #{tpu_custom_call.1} parent=1 // pred_fallthru
      _
    // Predicated region
    $region6: #{tpu_custom_call.1} parent=1 // pred_check
      _
    $region7: #{tpu_custom_call.1} parent=1 // pred_check_branch
      %29 = sbr.rel (0) target = $region9
    $region8: #{tpu_custom_call.1} parent=1 // pred_region
      %s31 = ssub.s32 1024, 1024
      %32 = vsyncadd [#allocation6], %s31
      %s33 = sshll.u32 [#allocation5], 4
      %s34 = int_to_ptr.vmem [resolvable:$true] %s33
      %39 = dma.hbm_to_vmem [thread:$0]  %s1, 1024, %s34, [#allocation6], 64, 64, 4
    $region9: #{tpu_custom_call.1} parent=1 // pred_fallthru
      _
    // Predicated region
    $region10: #{tpu_custom_call.1} parent=1 // pred_check
      _
    $region11: #{tpu_custom_call.1} parent=1 // pred_check_branch
      %41 = sbr.rel (0) target = $region13
    $region12: #{tpu_custom_call.1} parent=1 // pred_region
      _
    $region13: #{tpu_custom_call.1} parent=1 // pred_fallthru
      _
    // Predicated region
    $region14: #{tpu_custom_call.1} parent=1 // pred_check
      _
    $region15: #{tpu_custom_call.1} parent=1 // pred_check_branch
      %43 = sbr.rel (0) target = $region17
    $region16: #{tpu_custom_call.1} parent=1 // pred_region
      %s45 = ssub.s32 1024, 1024
      %46 = vsyncadd [#allocation6], %s45
      %s47 = sshll.u32 [#allocation7], 4
      %s48 = int_to_ptr.vmem [resolvable:$true] %s47
      %53 = dma.hbm_to_vmem [thread:$0]  %s3, 1024, %s48, [#allocation6], 64, 64, 4
    $region17: #{tpu_custom_call.1} parent=1 // pred_fallthru
      _
    // Predicated region
    $region18: #{tpu_custom_call.1} parent=1 // pred_check
      _
    $region19: #{tpu_custom_call.1} parent=1 // pred_check_branch
      %55 = sbr.rel (0) target = $region21
    $region20: #{tpu_custom_call.1} parent=1 // pred_region
      _
    $region21: #{tpu_custom_call.1} parent=1 // pred_fallthru
      _
    // Predicated region
    $region22: #{tpu_custom_call.1} parent=1 // pred_check
      _
    $region23: #{tpu_custom_call.1} parent=1 // pred_check_branch
      %57 = sbr.rel (0) target = $region25
    $region24: #{tpu_custom_call.1} parent=1 // pred_region
      %s59 = ssub.s32 1024, 1024
      %60 = vsyncadd [#allocation9], %s59
      %s61 = sshll.u32 [#allocation8], 4
      %s62 = int_to_ptr.vmem [resolvable:$true] %s61
      %67 = dma.hbm_to_vmem [thread:$0]  %s5, 1024, %s62, [#allocation9], 64, 64, 4
    $region25: #{tpu_custom_call.1} parent=1 // pred_fallthru
      _
    // Predicated region
    $region26: #{tpu_custom_call.1} parent=1 // pred_check
      _
    $region27: #{tpu_custom_call.1} parent=1 // pred_check_branch
      %69 = sbr.rel (0) target = $region29
    $region28: #{tpu_custom_call.1} parent=1 // pred_region
      _
    $region29: #{tpu_custom_call.1} parent=1 // pred_fallthru
      _
    // Predicated region
    $region30: #{tpu_custom_call.1} parent=1 // pred_check
      _
    $region31: #{tpu_custom_call.1} parent=1 // pred_check_branch
      %71 = sbr.rel (0) target = $region33
    $region32: #{tpu_custom_call.1} parent=1 // pred_region
      %s73 = ssub.s32 1024, 1024
      %74 = vsyncadd [#allocation9], %s73
      %s75 = sshll.u32 [#allocation10], 4
      %s76 = int_to_ptr.vmem [resolvable:$true] %s75
      %81 = dma.hbm_to_vmem [thread:$0]  %s7, 1024, %s76, [#allocation9], 64, 64, 4
    $region33: #{tpu_custom_call.1} parent=1 // pred_fallthru
      _
    // Predicated region
    $region34: #{tpu_custom_call.1} parent=1 // pred_check
      _
    $region35: #{tpu_custom_call.1} parent=1 // pred_check_branch
      %83 = sbr.rel (0) target = $region37
    $region36: #{tpu_custom_call.1} parent=1 // pred_region
      _
    $region37: #{tpu_custom_call.1} parent=1 // pred_fallthru
      _
    // Predicated region
    $region38: #{tpu_custom_call.1} parent=1 // pred_check
      _
    $region39: #{tpu_custom_call.1} parent=1 // pred_check_branch
      %85 = sbr.rel (0) target = $region41
    $region40: #{tpu_custom_call.1} parent=1 // pred_region
      %86 = dma.done [#allocation3], 128
    $region41: #{tpu_custom_call.1} parent=1 // pred_fallthru
      _
    // Predicated region
    $region42: #{tpu_custom_call.1} parent=1 // pred_check
      _
    $region43: #{tpu_custom_call.1} parent=1 // pred_check_branch
      %88 = sbr.rel (0) target = $region45
    $region44: #{tpu_custom_call.1} parent=1 // pred_region
      %89 = dma.done [#allocation6], 1024
    $region45: #{tpu_custom_call.1} parent=1 // pred_fallthru
      _
    // Predicated region
    $region46: #{tpu_custom_call.1} parent=1 // pred_check
      _
    $region47: #{tpu_custom_call.1} parent=1 // pred_check_branch
      %91 = sbr.rel (0) target = $region49
    $region48: #{tpu_custom_call.1} parent=1 // pred_region
      %92 = dma.done [#allocation6], 1024
    $region49: #{tpu_custom_call.1} parent=1 // pred_fallthru
      _
    // Predicated region
    $region50: #{tpu_custom_call.1} parent=1 // pred_check
      _
    $region51: #{tpu_custom_call.1} parent=1 // pred_check_branch
      %94 = sbr.rel (0) target = $region53
    $region52: #{tpu_custom_call.1} parent=1 // pred_region
      %95 = dma.done [#allocation9], 1024
    $region53: #{tpu_custom_call.1} parent=1 // pred_fallthru
      _
    // Predicated region
    $region54: #{tpu_custom_call.1} parent=1 // pred_check
      _
    $region55: #{tpu_custom_call.1} parent=1 // pred_check_branch
      %97 = sbr.rel (0) target = $region57
    $region56: #{tpu_custom_call.1} parent=1 // pred_region
      %98 = dma.done [#allocation9], 1024
    $region57: #{tpu_custom_call.1} parent=1 // pred_fallthru
      _
    %v100 = vld [vmem:[#allocation2] sm:$0xff]
    %v101 = vpack.c.bf16 %v100, %v100
    %v102 = vld [vmem:[#allocation5] sm:$0xf]
    %v103 = vld [vmem:[#allocation5 + $0x4] sm:$0xf]
    %v104 = vld [vmem:[#allocation5 + $0x8] sm:$0xf]
    %v105 = vld [vmem:[#allocation5 + $0xc] sm:$0xf]
    %v106 = vld [vmem:[#allocation5 + $0x10] sm:$0xf]
    %v107 = vld [vmem:[#allocation5 + $0x14] sm:$0xf]
    %v108 = vld [vmem:[#allocation5 + $0x18] sm:$0xf]
    %v109 = vld [vmem:[#allocation5 + $0x1c] sm:$0xf]
    %v110 = vld [vmem:[#allocation5 + $0x20] sm:$0xf]
    %v111 = vld [vmem:[#allocation5 + $0x24] sm:$0xf]
    %v112 = vld [vmem:[#allocation5 + $0x28] sm:$0xf]
    %v113 = vld [vmem:[#allocation5 + $0x2c] sm:$0xf]
    %v114 = vld [vmem:[#allocation5 + $0x30] sm:$0xf]
    %v115 = vld [vmem:[#allocation5 + $0x34] sm:$0xf]
    %v116 = vld [vmem:[#allocation5 + $0x38] sm:$0xf]
    %v117 = vld [vmem:[#allocation5 + $0x3c] sm:$0xf]
    %v118 = vld [vmem:[%s2] sm:$0x1]
    %v120 = vlaneseq
    %v121 = vshrl.u32 %v120, 7
    %v122 = vsub.s32 0, %v121
    %v123 = vrot.slane %v118, %v122
    %v141 = vunpack.c.l.b16 %v102
    %v142 = vunpack.c.l.b16 %v103
    %v143 = vunpack.c.l.b16 %v104
    %v144 = vunpack.c.l.b16 %v105
    %v145 = vunpack.c.l.b16 %v106
    %v146 = vunpack.c.l.b16 %v107
    %v147 = vunpack.c.l.b16 %v108
    %v148 = vunpack.c.l.b16 %v109
    %v149 = vunpack.c.l.b16 %v110
    %v150 = vunpack.c.l.b16 %v111
    %v151 = vunpack.c.l.b16 %v112
    %v152 = vunpack.c.l.b16 %v113
    %v153 = vunpack.c.l.b16 %v114
    %v154 = vunpack.c.l.b16 %v115
    %v155 = vunpack.c.l.b16 %v116
    %v156 = vunpack.c.l.b16 %v117
    %v157 = vpack.c.b16 %v142, %v141
    %v158 = vpack.c.b16 %v144, %v143
    %v159 = vpack.c.b16 %v146, %v145
    %v160 = vpack.c.b16 %v148, %v147
    %v161 = vpack.c.b16 %v150, %v149
    %v162 = vpack.c.b16 %v152, %v151
    %v163 = vpack.c.b16 %v154, %v153
    %v164 = vpack.c.b16 %v156, %v155
    %173 = vmatprep.subr.bf16.mxu0 0
    %174 = vmatpush1.bf16.msra.mxu0 %v157
    %175 = vmatprep.subr.bf16.mxu0 0
    %176 = vmatpush1.bf16.msra.mxu0 %v158
    %177 = vmatprep.subr.bf16.mxu0 0
    %178 = vmatpush1.bf16.msra.mxu0 %v159
    %179 = vmatprep.subr.bf16.mxu0 0
    %180 = vmatpush1.bf16.msra.mxu0 %v160
    %181 = vmatprep.subr.bf16.mxu0 0
    %182 = vmatpush1.bf16.msra.mxu0 %v161
    %183 = vmatprep.subr.bf16.mxu0 0
    %184 = vmatpush1.bf16.msra.mxu0 %v162
    %185 = vmatprep.subr.bf16.mxu0 0
    %186 = vmatpush1.bf16.msra.mxu0 %v163
    %187 = vmatprep.subr.bf16.mxu0 0
    %188 = vmatpush1.bf16.msra.mxu0 %v164
    %189 = vmatprep.subr.bf16.mxu0 0
    %190 = vmatpush1.bf16.msra.mxu0 0
    %191 = vmatprep.subr.bf16.mxu0 0
    %192 = vmatpush1.bf16.msra.mxu0 0
    %193 = vmatprep.subr.bf16.mxu0 0
    %194 = vmatpush1.bf16.msra.mxu0 0
    %195 = vmatprep.subr.bf16.mxu0 0
    %196 = vmatpush1.bf16.msra.mxu0 0
    %197 = vmatprep.subr.bf16.mxu0 0
    %198 = vmatpush1.bf16.msra.mxu0 0
    %199 = vmatprep.subr.bf16.mxu0 0
    %200 = vmatpush1.bf16.msra.mxu0 0
    %201 = vmatprep.subr.bf16.mxu0 0
    %202 = vmatpush1.bf16.msra.mxu0 0
    %203 = vmatprep.subr.bf16.mxu0 0
    %204 = vmatpush1.bf16.msra.mxu0 0
    %205 = vmatprep.mubr.bf16.mxu0 0
    %206 = vmatmul.mubr.bf16.gmra.mrb[0].mxu0 %v101
    %v207 = vpop.f32.mrb[0].mxu0
    %v208 = vadd.f32 %v123, %v207
    %v209 = vpop.f32.mrb[0].mxu0
    %v210 = vpop.f32.mrb[0].mxu0
    %v211 = vpop.f32.mrb[0].mxu0
    %212 = vdwg.mxu0
    %v213 = vmax.f32 %v208, 0.0
    %v214 = vpack.c.bf16 %v213, %v213
    %v215 = vld [vmem:[#allocation7] sm:$0xf]
    %v216 = vld [vmem:[#allocation7 + $0x4] sm:$0xf]
    %v217 = vld [vmem:[#allocation7 + $0x8] sm:$0xf]
    %v218 = vld [vmem:[#allocation7 + $0xc] sm:$0xf]
    %v219 = vld [vmem:[#allocation7 + $0x10] sm:$0xf]
    %v220 = vld [vmem:[#allocation7 + $0x14] sm:$0xf]
    %v221 = vld [vmem:[#allocation7 + $0x18] sm:$0xf]
    %v222 = vld [vmem:[#allocation7 + $0x1c] sm:$0xf]
    %v223 = vld [vmem:[#allocation7 + $0x20] sm:$0xf]
    %v224 = vld [vmem:[#allocation7 + $0x24] sm:$0xf]
    %v225 = vld [vmem:[#allocation7 + $0x28] sm:$0xf]
    %v226 = vld [vmem:[#allocation7 + $0x2c] sm:$0xf]
    %v227 = vld [vmem:[#allocation7 + $0x30] sm:$0xf]
    %v228 = vld [vmem:[#allocation7 + $0x34] sm:$0xf]
    %v229 = vld [vmem:[#allocation7 + $0x38] sm:$0xf]
    %v230 = vld [vmem:[#allocation7 + $0x3c] sm:$0xf]
    %v231 = vld [vmem:[%s4] sm:$0x1]
    %v233 = vlaneseq
    %v234 = vshrl.u32 %v233, 7
    %v235 = vsub.s32 0, %v234
    %v236 = vrot.slane %v231, %v235
    %v254 = vunpack.c.l.b16 %v215
    %v255 = vunpack.c.l.b16 %v216
    %v256 = vunpack.c.l.b16 %v217
    %v257 = vunpack.c.l.b16 %v218
    %v258 = vunpack.c.l.b16 %v219
    %v259 = vunpack.c.l.b16 %v220
    %v260 = vunpack.c.l.b16 %v221
    %v261 = vunpack.c.l.b16 %v222
    %v262 = vunpack.c.l.b16 %v223
    %v263 = vunpack.c.l.b16 %v224
    %v264 = vunpack.c.l.b16 %v225
    %v265 = vunpack.c.l.b16 %v226
    %v266 = vunpack.c.l.b16 %v227
    %v267 = vunpack.c.l.b16 %v228
    %v268 = vunpack.c.l.b16 %v229
    %v269 = vunpack.c.l.b16 %v230
    %v270 = vpack.c.b16 %v255, %v254
    %v271 = vpack.c.b16 %v257, %v256
    %v272 = vpack.c.b16 %v259, %v258
    %v273 = vpack.c.b16 %v261, %v260
    %v274 = vpack.c.b16 %v263, %v262
    %v275 = vpack.c.b16 %v265, %v264
    %v276 = vpack.c.b16 %v267, %v266
    %v277 = vpack.c.b16 %v269, %v268
    %286 = vmatprep.subr.bf16.mxu0 0
    %287 = vmatpush1.bf16.msra.mxu0 %v270
    %288 = vmatprep.subr.bf16.mxu0 0
    %289 = vmatpush1.bf16.msra.mxu0 %v271
    %290 = vmatprep.subr.bf16.mxu0 0
    %291 = vmatpush1.bf16.msra.mxu0 %v272
    %292 = vmatprep.subr.bf16.mxu0 0
    %293 = vmatpush1.bf16.msra.mxu0 %v273
    %294 = vmatprep.subr.bf16.mxu0 0
    %295 = vmatpush1.bf16.msra.mxu0 %v274
    %296 = vmatprep.subr.bf16.mxu0 0
    %297 = vmatpush1.bf16.msra.mxu0 %v275
    %298 = vmatprep.subr.bf16.mxu0 0
    %299 = vmatpush1.bf16.msra.mxu0 %v276
    %300 = vmatprep.subr.bf16.mxu0 0
    %301 = vmatpush1.bf16.msra.mxu0 %v277
    %302 = vmatprep.subr.bf16.mxu0 0
    %303 = vmatpush1.bf16.msra.mxu0 0
    %304 = vmatprep.subr.bf16.mxu0 0
    %305 = vmatpush1.bf16.msra.mxu0 0
    %306 = vmatprep.subr.bf16.mxu0 0
    %307 = vmatpush1.bf16.msra.mxu0 0
    %308 = vmatprep.subr.bf16.mxu0 0
    %309 = vmatpush1.bf16.msra.mxu0 0
    %310 = vmatprep.subr.bf16.mxu0 0
    %311 = vmatpush1.bf16.msra.mxu0 0
    %312 = vmatprep.subr.bf16.mxu0 0
    %313 = vmatpush1.bf16.msra.mxu0 0
    %314 = vmatprep.subr.bf16.mxu0 0
    %315 = vmatpush1.bf16.msra.mxu0 0
    %316 = vmatprep.subr.bf16.mxu0 0
    %317 = vmatpush1.bf16.msra.mxu0 0
    %318 = vmatprep.mubr.bf16.mxu0 0
    %319 = vmatmul.mubr.bf16.gmra.mrb[0].mxu0 %v214
    %v320 = vpop.f32.mrb[0].mxu0
    %v321 = vadd.f32 %v236, %v320
    %v322 = vpop.f32.mrb[0].mxu0
    %v323 = vpop.f32.mrb[0].mxu0
    %v324 = vpop.f32.mrb[0].mxu0
    %325 = vdwg.mxu0
    %v326 = vmax.f32 %v321, 0.0
    %v327 = vpack.c.bf16 %v326, %v326
    %v328 = vld [vmem:[#allocation8] sm:$0xf]
    %v329 = vld [vmem:[#allocation8 + $0x4] sm:$0xf]
    %v330 = vld [vmem:[#allocation8 + $0x8] sm:$0xf]
    %v331 = vld [vmem:[#allocation8 + $0xc] sm:$0xf]
    %v332 = vld [vmem:[#allocation8 + $0x10] sm:$0xf]
    %v333 = vld [vmem:[#allocation8 + $0x14] sm:$0xf]
    %v334 = vld [vmem:[#allocation8 + $0x18] sm:$0xf]
    %v335 = vld [vmem:[#allocation8 + $0x1c] sm:$0xf]
    %v336 = vld [vmem:[#allocation8 + $0x20] sm:$0xf]
    %v337 = vld [vmem:[#allocation8 + $0x24] sm:$0xf]
    %v338 = vld [vmem:[#allocation8 + $0x28] sm:$0xf]
    %v339 = vld [vmem:[#allocation8 + $0x2c] sm:$0xf]
    %v340 = vld [vmem:[#allocation8 + $0x30] sm:$0xf]
    %v341 = vld [vmem:[#allocation8 + $0x34] sm:$0xf]
    %v342 = vld [vmem:[#allocation8 + $0x38] sm:$0xf]
    %v343 = vld [vmem:[#allocation8 + $0x3c] sm:$0xf]
    %v344 = vld [vmem:[%s6] sm:$0x1]
    %v346 = vlaneseq
    %v347 = vshrl.u32 %v346, 7
    %v348 = vsub.s32 0, %v347
    %v349 = vrot.slane %v344, %v348
    %v367 = vunpack.c.l.b16 %v328
    %v368 = vunpack.c.l.b16 %v329
    %v369 = vunpack.c.l.b16 %v330
    %v370 = vunpack.c.l.b16 %v331
    %v371 = vunpack.c.l.b16 %v332
    %v372 = vunpack.c.l.b16 %v333
    %v373 = vunpack.c.l.b16 %v334
    %v374 = vunpack.c.l.b16 %v335
    %v375 = vunpack.c.l.b16 %v336
    %v376 = vunpack.c.l.b16 %v337
    %v377 = vunpack.c.l.b16 %v338
    %v378 = vunpack.c.l.b16 %v339
    %v379 = vunpack.c.l.b16 %v340
    %v380 = vunpack.c.l.b16 %v341
    %v381 = vunpack.c.l.b16 %v342
    %v382 = vunpack.c.l.b16 %v343
    %v383 = vpack.c.b16 %v368, %v367
    %v384 = vpack.c.b16 %v370, %v369
    %v385 = vpack.c.b16 %v372, %v371
    %v386 = vpack.c.b16 %v374, %v373
    %v387 = vpack.c.b16 %v376, %v375
    %v388 = vpack.c.b16 %v378, %v377
    %v389 = vpack.c.b16 %v380, %v379
    %v390 = vpack.c.b16 %v382, %v381
    %399 = vmatprep.subr.bf16.mxu0 0
    %400 = vmatpush1.bf16.msra.mxu0 %v383
    %401 = vmatprep.subr.bf16.mxu0 0
    %402 = vmatpush1.bf16.msra.mxu0 %v384
    %403 = vmatprep.subr.bf16.mxu0 0
    %404 = vmatpush1.bf16.msra.mxu0 %v385
    %405 = vmatprep.subr.bf16.mxu0 0
    %406 = vmatpush1.bf16.msra.mxu0 %v386
    %407 = vmatprep.subr.bf16.mxu0 0
    %408 = vmatpush1.bf16.msra.mxu0 %v387
    %409 = vmatprep.subr.bf16.mxu0 0
    %410 = vmatpush1.bf16.msra.mxu0 %v388
    %411 = vmatprep.subr.bf16.mxu0 0
    %412 = vmatpush1.bf16.msra.mxu0 %v389
    %413 = vmatprep.subr.bf16.mxu0 0
    %414 = vmatpush1.bf16.msra.mxu0 %v390
    %415 = vmatprep.subr.bf16.mxu0 0
    %416 = vmatpush1.bf16.msra.mxu0 0
    %417 = vmatprep.subr.bf16.mxu0 0
    %418 = vmatpush1.bf16.msra.mxu0 0
    %419 = vmatprep.subr.bf16.mxu0 0
    %420 = vmatpush1.bf16.msra.mxu0 0
    %421 = vmatprep.subr.bf16.mxu0 0
    %422 = vmatpush1.bf16.msra.mxu0 0
    %423 = vmatprep.subr.bf16.mxu0 0
    %424 = vmatpush1.bf16.msra.mxu0 0
    %425 = vmatprep.subr.bf16.mxu0 0
    %426 = vmatpush1.bf16.msra.mxu0 0
    %427 = vmatprep.subr.bf16.mxu0 0
    %428 = vmatpush1.bf16.msra.mxu0 0
    %429 = vmatprep.subr.bf16.mxu0 0
    %430 = vmatpush1.bf16.msra.mxu0 0
    %431 = vmatprep.mubr.bf16.mxu0 0
    %432 = vmatmul.mubr.bf16.gmra.mrb[0].mxu0 %v327
    %v433 = vpop.f32.mrb[0].mxu0
    %v434 = vadd.f32 %v349, %v433
    %v435 = vpop.f32.mrb[0].mxu0
    %v436 = vpop.f32.mrb[0].mxu0
    %v437 = vpop.f32.mrb[0].mxu0
    %438 = vdwg.mxu0
    %v439 = vmax.f32 %v434, 0.0
    %v440 = vpack.c.bf16 %v439, %v439
    %v441 = vld [vmem:[#allocation10] sm:$0xf]
    %v442 = vld [vmem:[#allocation10 + $0x4] sm:$0xf]
    %v443 = vld [vmem:[#allocation10 + $0x8] sm:$0xf]
    %v444 = vld [vmem:[#allocation10 + $0xc] sm:$0xf]
    %v445 = vld [vmem:[#allocation10 + $0x10] sm:$0xf]
    %v446 = vld [vmem:[#allocation10 + $0x14] sm:$0xf]
    %v447 = vld [vmem:[#allocation10 + $0x18] sm:$0xf]
    %v448 = vld [vmem:[#allocation10 + $0x1c] sm:$0xf]
    %v449 = vld [vmem:[#allocation10 + $0x20] sm:$0xf]
    %v450 = vld [vmem:[#allocation10 + $0x24] sm:$0xf]
    %v451 = vld [vmem:[#allocation10 + $0x28] sm:$0xf]
    %v452 = vld [vmem:[#allocation10 + $0x2c] sm:$0xf]
    %v453 = vld [vmem:[#allocation10 + $0x30] sm:$0xf]
    %v454 = vld [vmem:[#allocation10 + $0x34] sm:$0xf]
    %v455 = vld [vmem:[#allocation10 + $0x38] sm:$0xf]
    %v456 = vld [vmem:[#allocation10 + $0x3c] sm:$0xf]
    %v457 = vld [vmem:[%s8] sm:$0x1]
    %v459 = vlaneseq
    %v460 = vshrl.u32 %v459, 7
    %v461 = vsub.s32 0, %v460
    %v462 = vrot.slane %v457, %v461
    %v480 = vunpack.c.l.b16 %v441
    %v481 = vunpack.c.l.b16 %v442
    %v482 = vunpack.c.l.b16 %v443
    %v483 = vunpack.c.l.b16 %v444
    %v484 = vunpack.c.l.b16 %v445
    %v485 = vunpack.c.l.b16 %v446
    %v486 = vunpack.c.l.b16 %v447
    %v487 = vunpack.c.l.b16 %v448
    %v488 = vunpack.c.l.b16 %v449
    %v489 = vunpack.c.l.b16 %v450
    %v490 = vunpack.c.l.b16 %v451
    %v491 = vunpack.c.l.b16 %v452
    %v492 = vunpack.c.l.b16 %v453
    %v493 = vunpack.c.l.b16 %v454
    %v494 = vunpack.c.l.b16 %v455
    %v495 = vunpack.c.l.b16 %v456
    %v496 = vpack.c.b16 %v481, %v480
    %v497 = vpack.c.b16 %v483, %v482
    %v498 = vpack.c.b16 %v485, %v484
    %v499 = vpack.c.b16 %v487, %v486
    %v500 = vpack.c.b16 %v489, %v488
    %v501 = vpack.c.b16 %v491, %v490
    %v502 = vpack.c.b16 %v493, %v492
    %v503 = vpack.c.b16 %v495, %v494
    %512 = vmatprep.subr.bf16.mxu0 0
    %513 = vmatpush1.bf16.msra.mxu0 %v496
    %514 = vmatprep.subr.bf16.mxu0 0
    %515 = vmatpush1.bf16.msra.mxu0 %v497
    %516 = vmatprep.subr.bf16.mxu0 0
    %517 = vmatpush1.bf16.msra.mxu0 %v498
    %518 = vmatprep.subr.bf16.mxu0 0
    %519 = vmatpush1.bf16.msra.mxu0 %v499
    %520 = vmatprep.subr.bf16.mxu0 0
    %521 = vmatpush1.bf16.msra.mxu0 %v500
    %522 = vmatprep.subr.bf16.mxu0 0
    %523 = vmatpush1.bf16.msra.mxu0 %v501
    %524 = vmatprep.subr.bf16.mxu0 0
    %525 = vmatpush1.bf16.msra.mxu0 %v502
    %526 = vmatprep.subr.bf16.mxu0 0
    %527 = vmatpush1.bf16.msra.mxu0 %v503
    %528 = vmatprep.subr.bf16.mxu0 0
    %529 = vmatpush1.bf16.msra.mxu0 0
    %530 = vmatprep.subr.bf16.mxu0 0
    %531 = vmatpush1.bf16.msra.mxu0 0
    %532 = vmatprep.subr.bf16.mxu0 0
    %533 = vmatpush1.bf16.msra.mxu0 0
    %534 = vmatprep.subr.bf16.mxu0 0
    %535 = vmatpush1.bf16.msra.mxu0 0
    %536 = vmatprep.subr.bf16.mxu0 0
    %537 = vmatpush1.bf16.msra.mxu0 0
    %538 = vmatprep.subr.bf16.mxu0 0
    %539 = vmatpush1.bf16.msra.mxu0 0
    %540 = vmatprep.subr.bf16.mxu0 0
    %541 = vmatpush1.bf16.msra.mxu0 0
    %542 = vmatprep.subr.bf16.mxu0 0
    %543 = vmatpush1.bf16.msra.mxu0 0
    %544 = vmatprep.mubr.bf16.mxu0 0
    %545 = vmatmul.mubr.bf16.gmra.mrb[0].mxu0 %v440
    %v546 = vpop.f32.mrb[0].mxu0
    %v547 = vadd.f32 %v462, %v546
    %v548 = vpop.f32.mrb[0].mxu0
    %v549 = vpop.f32.mrb[0].mxu0
    %v550 = vpop.f32.mrb[0].mxu0
    %551 = vdwg.mxu0
    %v552 = vmax.f32 %v547, 0.0
    %553 = vst [vmem:[#allocation11] sm:$0xff] %v552
    // Predicated region
    $region58: #{tpu_custom_call.1} parent=1 // pred_check
      _
    $region59: #{tpu_custom_call.1} parent=1 // pred_check_branch
      %555 = sbr.rel (0) target = $region61
    $region60: #{tpu_custom_call.1} parent=1 // pred_region
      %s557 = ssub.s32 128, 128
      %558 = vsyncadd [#allocation4], %s557
      %s560 = sshll.u32 [#allocation11], 4
      %s561 = int_to_ptr.vmem [resolvable:$true] %s560
      %563 = dma.vmem_to_hbm [thread:$0]  %s561, 128, %s9, [#allocation4]
    $region61: #{tpu_custom_call.1} parent=1 // pred_fallthru
      _
    // Predicated region
    $region62: #{tpu_custom_call.1} parent=1 // pred_check
      _
    $region63: #{tpu_custom_call.1} parent=1 // pred_check_branch
      %565 = sbr.rel (0) target = $region65
    $region64: #{tpu_custom_call.1} parent=1 // pred_region
      %566 = dma.done [#allocation4], 128
    $region65: #{tpu_custom_call.1} parent=1 // pred_fallthru
      _
    %567 = vsyncpa [#allocation3], 1
    %568 = vsyncpa [#allocation6], 1
    %569 = vsyncpa [#allocation9], 1
    %570 = vsyncpa [#allocation4], 1

// kernel: tpu_custom_call.1
$region0: #{tpu_custom_call.1}
  #allocation0 [shape = 'u32[]', space=smem, size = 0x4, offset = 0x4, fixed_abs, tag = 'smem constant byte address 0x4 - core index']
  #allocation1 [shape = 'u32[144,128]{1,0:T(1,128)}', space=vmem, size = 0x12000, scoped, tag = 'internal scratch']
  %s0 = inlined_call_operand.hbm [shape: f32[8,128], index: 0, kind: input, shape index: {}]
  %s1 = inlined_call_operand.hbm [shape: bf16[128,128], index: 1, kind: input, shape index: {}]
  %s2 = inlined_call_operand.vmem [shape: f32[1,128], index: 2, kind: input, shape index: {}]
  %s3 = inlined_call_operand.hbm [shape: bf16[128,128], index: 3, kind: input, shape index: {}]
  %s4 = inlined_call_operand.vmem [shape: f32[1,128], index: 4, kind: input, shape index: {}]
  %s5 = inlined_call_operand.hbm [shape: bf16[128,128], index: 5, kind: input, shape index: {}]
  %s6 = inlined_call_operand.vmem [shape: f32[1,128], index: 6, kind: input, shape index: {}]
  %s7 = inlined_call_operand.hbm [shape: bf16[128,128], index: 7, kind: input, shape index: {}]
  %s8 = inlined_call_operand.vmem [shape: f32[1,128], index: 8, kind: input, shape index: {}]
  %s9 = inlined_call_operand.hbm [shape: f32[8,128], index: 9, kind: output, shape index: {}]
  %s10 = sld [smem:[#allocation0]]
  $region66: #{tpu_custom_call.1} parent=0
    _
  %s12 = ssub.s32 1, %s10
  %s13 = scalar_select 0, %s12, %s10
  $region1: #{tpu_custom_call.1} parent=0
    #allocation2 [shape = 'u8[4096]{0}', space=vmem, size = 0x1000, scoped, tag = 'input window, operand 0, single buffered']
    #allocation3 [shape = 's32[1]{0}', space=sflag, size = 0x4, scoped, tag = 'scoped memory for tpu_custom_call.1']
    #allocation4 [shape = 's32[1]{0}', space=sflag, size = 0x4, scoped, tag = 'scoped memory for tpu_custom_call.1']
    #allocation5 [shape = 'u8[32768]{0}', space=vmem, size = 0x8000, scoped, tag = 'input window, operand 1, single buffered']
    #allocation6 [shape = 's32[1]{0}', space=sflag, size = 0x4, scoped, tag = 'scoped memory for tpu_custom_call.1']
    #allocation7 [shape = 'u8[32768]{0}', space=vmem, size = 0x8000, scoped, tag = 'input window, operand 3, single buffered']
    #allocation8 [shape = 'u8[32768]{0}', space=vmem, size = 0x8000, scoped, tag = 'input window, operand 5, single buffered']
    #allocation9 [shape = 's32[1]{0}', space=sflag, size = 0x4, scoped, tag = 'scoped memory for tpu_custom_call.1']
    #allocation10 [shape = 'u8[32768]{0}', space=vmem, size = 0x8000, scoped, tag = 'input window, operand 7, single buffered']
    #allocation11 [shape = 'u8[4096]{0}', space=vmem, size = 0x1000, scoped, tag = 'output window, operand 0, single buffered']
    %14 = vsyncpa [#allocation3], 0
    %15 = vsyncpa [#allocation6], 0
    %16 = vsyncpa [#allocation9], 0
    %17 = vsyncpa [#allocation4], 0
    // Predicated region
    $region2: #{tpu_custom_call.1} parent=1 // pred_check
      _
    $region3: #{tpu_custom_call.1} parent=1 // pred_check_branch
      %19 = sbr.rel (0) target = $region5
    $region4: #{tpu_custom_call.1} parent=1 // pred_region
      %s21 = ssub.s32 128, 128
      %22 = vsyncadd [#allocation3], %s21
      %s24 = sshll.u32 [#allocation2], 4
      %s25 = int_to_ptr.vmem [resolvable:$true] %s24
      %27 = dma.hbm_to_vmem [thread:$0]  %s0, 128, %s25, [#allocation3]
    $region5: #{tpu_custom_call.1} parent=1 // pred_fallthru
      _
    // Predicated region
    $region6: #{tpu_custom_call.1} parent=1 // pred_check
      _
    $region7: #{tpu_custom_call.1} parent=1 // pred_check_branch
      %29 = sbr.rel (0) target = $region9
    $region8: #{tpu_custom_call.1} parent=1 // pred_region
      %s31 = ssub.s32 1024, 1024
      %32 = vsyncadd [#allocation6], %s31
      %s33 = sshll.u32 [#allocation5], 4
      %s34 = int_to_ptr.vmem [resolvable:$true] %s33
      %39 = dma.hbm_to_vmem [thread:$0]  %s1, 1024, %s34, [#allocation6], 64, 64, 4
    $region9: #{tpu_custom_call.1} parent=1 // pred_fallthru
      _
    // Predicated region
    $region10: #{tpu_custom_call.1} parent=1 // pred_check
      _
    $region11: #{tpu_custom_call.1} parent=1 // pred_check_branch
      %41 = sbr.rel (0) target = $region13
    $region12: #{tpu_custom_call.1} parent=1 // pred_region
      _
    $region13: #{tpu_custom_call.1} parent=1 // pred_fallthru
      _
    // Predicated region
    $region14: #{tpu_custom_call.1} parent=1 // pred_check
      _
    $region15: #{tpu_custom_call.1} parent=1 // pred_check_branch
      %43 = sbr.rel (0) target = $region17
    $region16: #{tpu_custom_call.1} parent=1 // pred_region
      %s45 = ssub.s32 1024, 1024
      %46 = vsyncadd [#allocation6], %s45
      %s47 = sshll.u32 [#allocation7], 4
      %s48 = int_to_ptr.vmem [resolvable:$true] %s47
      %53 = dma.hbm_to_vmem [thread:$0]  %s3, 1024, %s48, [#allocation6], 64, 64, 4
    $region17: #{tpu_custom_call.1} parent=1 // pred_fallthru
      _
    // Predicated region
    $region18: #{tpu_custom_call.1} parent=1 // pred_check
      _
    $region19: #{tpu_custom_call.1} parent=1 // pred_check_branch
      %55 = sbr.rel (0) target = $region21
    $region20: #{tpu_custom_call.1} parent=1 // pred_region
      _
    $region21: #{tpu_custom_call.1} parent=1 // pred_fallthru
      _
    // Predicated region
    $region22: #{tpu_custom_call.1} parent=1 // pred_check
      _
    $region23: #{tpu_custom_call.1} parent=1 // pred_check_branch
      %57 = sbr.rel (0) target = $region25
    $region24: #{tpu_custom_call.1} parent=1 // pred_region
      %s59 = ssub.s32 1024, 1024
      %60 = vsyncadd [#allocation9], %s59
      %s61 = sshll.u32 [#allocation8], 4
      %s62 = int_to_ptr.vmem [resolvable:$true] %s61
      %67 = dma.hbm_to_vmem [thread:$0]  %s5, 1024, %s62, [#allocation9], 64, 64, 4
    $region25: #{tpu_custom_call.1} parent=1 // pred_fallthru
      _
    // Predicated region
    $region26: #{tpu_custom_call.1} parent=1 // pred_check
      _
    $region27: #{tpu_custom_call.1} parent=1 // pred_check_branch
      %69 = sbr.rel (0) target = $region29
    $region28: #{tpu_custom_call.1} parent=1 // pred_region
      _
    $region29: #{tpu_custom_call.1} parent=1 // pred_fallthru
      _
    // Predicated region
    $region30: #{tpu_custom_call.1} parent=1 // pred_check
      _
    $region31: #{tpu_custom_call.1} parent=1 // pred_check_branch
      %71 = sbr.rel (0) target = $region33
    $region32: #{tpu_custom_call.1} parent=1 // pred_region
      %s73 = ssub.s32 1024, 1024
      %74 = vsyncadd [#allocation9], %s73
      %s75 = sshll.u32 [#allocation10], 4
      %s76 = int_to_ptr.vmem [resolvable:$true] %s75
      %81 = dma.hbm_to_vmem [thread:$0]  %s7, 1024, %s76, [#allocation9], 64, 64, 4
    $region33: #{tpu_custom_call.1} parent=1 // pred_fallthru
      _
    // Predicated region
    $region34: #{tpu_custom_call.1} parent=1 // pred_check
      _
    $region35: #{tpu_custom_call.1} parent=1 // pred_check_branch
      %83 = sbr.rel (0) target = $region37
    $region36: #{tpu_custom_call.1} parent=1 // pred_region
      _
    $region37: #{tpu_custom_call.1} parent=1 // pred_fallthru
      _
    // Predicated region
    $region38: #{tpu_custom_call.1} parent=1 // pred_check
      _
    $region39: #{tpu_custom_call.1} parent=1 // pred_check_branch
      %85 = sbr.rel (0) target = $region41
    $region40: #{tpu_custom_call.1} parent=1 // pred_region
      %86 = dma.done [#allocation3], 128
    $region41: #{tpu_custom_call.1} parent=1 // pred_fallthru
      _
    // Predicated region
    $region42: #{tpu_custom_call.1} parent=1 // pred_check
      _
    $region43: #{tpu_custom_call.1} parent=1 // pred_check_branch
      %88 = sbr.rel (0) target = $region45
    $region44: #{tpu_custom_call.1} parent=1 // pred_region
      %89 = dma.done [#allocation6], 1024
    $region45: #{tpu_custom_call.1} parent=1 // pred_fallthru
      _
    // Predicated region
    $region46: #{tpu_custom_call.1} parent=1 // pred_check
      _
    $region47: #{tpu_custom_call.1} parent=1 // pred_check_branch
      %91 = sbr.rel (0) target = $region49
    $region48: #{tpu_custom_call.1} parent=1 // pred_region
      %92 = dma.done [#allocation6], 1024
    $region49: #{tpu_custom_call.1} parent=1 // pred_fallthru
      _
    // Predicated region
    $region50: #{tpu_custom_call.1} parent=1 // pred_check
      _
    $region51: #{tpu_custom_call.1} parent=1 // pred_check_branch
      %94 = sbr.rel (0) target = $region53
    $region52: #{tpu_custom_call.1} parent=1 // pred_region
      %95 = dma.done [#allocation9], 1024
    $region53: #{tpu_custom_call.1} parent=1 // pred_fallthru
      _
    // Predicated region
    $region54: #{tpu_custom_call.1} parent=1 // pred_check
      _
    $region55: #{tpu_custom_call.1} parent=1 // pred_check_branch
      %97 = sbr.rel (0) target = $region57
    $region56: #{tpu_custom_call.1} parent=1 // pred_region
      %98 = dma.done [#allocation9], 1024
    $region57: #{tpu_custom_call.1} parent=1 // pred_fallthru
      _
    %v100 = vld [vmem:[#allocation2] sm:$0xff]
    %v101 = vpack.c.bf16 %v100, %v100
    %v102 = vld [vmem:[#allocation5] sm:$0xf]
    %v103 = vld [vmem:[#allocation5 + $0x4] sm:$0xf]
    %v104 = vld [vmem:[#allocation5 + $0x8] sm:$0xf]
    %v105 = vld [vmem:[#allocation5 + $0xc] sm:$0xf]
    %v106 = vld [vmem:[#allocation5 + $0x10] sm:$0xf]
    %v107 = vld [vmem:[#allocation5 + $0x14] sm:$0xf]
    %v108 = vld [vmem:[#allocation5 + $0x18] sm:$0xf]
    %v109 = vld [vmem:[#allocation5 + $0x1c] sm:$0xf]
    %v110 = vld [vmem:[#allocation5 + $0x20] sm:$0xf]
    %v111 = vld [vmem:[#allocation5 + $0x24] sm:$0xf]
    %v112 = vld [vmem:[#allocation5 + $0x28] sm:$0xf]
    %v113 = vld [vmem:[#allocation5 + $0x2c] sm:$0xf]
    %v114 = vld [vmem:[#allocation5 + $0x30] sm:$0xf]
    %v115 = vld [vmem:[#allocation5 + $0x34] sm:$0xf]
    %v116 = vld [vmem:[#allocation5 + $0x38] sm:$0xf]
    %v117 = vld [vmem:[#allocation5 + $0x3c] sm:$0xf]
    %v118 = vld [vmem:[%s2] sm:$0x1]
    %v120 = vlaneseq
    %v121 = vshrl.u32 %v120, 7
    %v122 = vsub.s32 0, %v121
    %v123 = vrot.slane %v118, %v122
    %v141 = vunpack.c.l.b16 %v102
    %v142 = vunpack.c.l.b16 %v103
    %v143 = vunpack.c.l.b16 %v104
    %v144 = vunpack.c.l.b16 %v105
    %v145 = vunpack.c.l.b16 %v106
    %v146 = vunpack.c.l.b16 %v107
    %v147 = vunpack.c.l.b16 %v108
    %v148 = vunpack.c.l.b16 %v109
    %v149 = vunpack.c.l.b16 %v110
    %v150 = vunpack.c.l.b16 %v111
    %v151 = vunpack.c.l.b16 %v112
    %v152 = vunpack.c.l.b16 %v113
    %v153 = vunpack.c.l.b16 %v114
    %v154 = vunpack.c.l.b16 %v115
    %v155 = vunpack.c.l.b16 %v116
    %v156 = vunpack.c.l.b16 %v117
    %v157 = vpack.c.b16 %v142, %v141
    %v158 = vpack.c.b16 %v144, %v143
    %v159 = vpack.c.b16 %v146, %v145
    %v160 = vpack.c.b16 %v148, %v147
    %v161 = vpack.c.b16 %v150, %v149
    %v162 = vpack.c.b16 %v152, %v151
    %v163 = vpack.c.b16 %v154, %v153
    %v164 = vpack.c.b16 %v156, %v155
    %173 = vmatprep.subr.bf16.mxu0 0
    %174 = vmatpush1.bf16.msra.mxu0 %v157
    %175 = vmatprep.subr.bf16.mxu0 0
    %176 = vmatpush1.bf16.msra.mxu0 %v158
    %177 = vmatprep.subr.bf16.mxu0 0
    %178 = vmatpush1.bf16.msra.mxu0 %v159
    %179 = vmatprep.subr.bf16.mxu0 0
    %180 = vmatpush1.bf16.msra.mxu0 %v160
    %181 = vmatprep.subr.bf16.mxu0 0
    %182 = vmatpush1.bf16.msra.mxu0 %v161
    %183 = vmatprep.subr.bf16.mxu0 0
    %184 = vmatpush1.bf16.msra.mxu0 %v162
    %185 = vmatprep.subr.bf16.mxu0 0
    %186 = vmatpush1.bf16.msra.mxu0 %v163
    %187 = vmatprep.subr.bf16.mxu0 0
    %188 = vmatpush1.bf16.msra.mxu0 %v164
    %189 = vmatprep.subr.bf16.mxu0 0
    %190 = vmatpush1.bf16.msra.mxu0 0
    %191 = vmatprep.subr.bf16.mxu0 0
    %192 = vmatpush1.bf16.msra.mxu0 0
    %193 = vmatprep.subr.bf16.mxu0 0
    %194 = vmatpush1.bf16.msra.mxu0 0
    %195 = vmatprep.subr.bf16.mxu0 0
    %196 = vmatpush1.bf16.msra.mxu0 0
    %197 = vmatprep.subr.bf16.mxu0 0
    %198 = vmatpush1.bf16.msra.mxu0 0
    %199 = vmatprep.subr.bf16.mxu0 0
    %200 = vmatpush1.bf16.msra.mxu0 0
    %201 = vmatprep.subr.bf16.mxu0 0
    %202 = vmatpush1.bf16.msra.mxu0 0
    %203 = vmatprep.subr.bf16.mxu0 0
    %204 = vmatpush1.bf16.msra.mxu0 0
    %205 = vmatprep.mubr.bf16.mxu0 0
    %206 = vmatmul.mubr.bf16.gmra.mrb[0].mxu0 %v101
    %v207 = vpop.f32.mrb[0].mxu0
    %v208 = vadd.f32 %v123, %v207
    %v209 = vpop.f32.mrb[0].mxu0
    %v210 = vpop.f32.mrb[0].mxu0
    %v211 = vpop.f32.mrb[0].mxu0
    %212 = vdwg.mxu0
    %v213 = vmax.f32 %v208, 0.0
    %v214 = vpack.c.bf16 %v213, %v213
    %v215 = vld [vmem:[#allocation7] sm:$0xf]
    %v216 = vld [vmem:[#allocation7 + $0x4] sm:$0xf]
    %v217 = vld [vmem:[#allocation7 + $0x8] sm:$0xf]
    %v218 = vld [vmem:[#allocation7 + $0xc] sm:$0xf]
    %v219 = vld [vmem:[#allocation7 + $0x10] sm:$0xf]
    %v220 = vld [vmem:[#allocation7 + $0x14] sm:$0xf]
    %v221 = vld [vmem:[#allocation7 + $0x18] sm:$0xf]
    %v222 = vld [vmem:[#allocation7 + $0x1c] sm:$0xf]
    %v223 = vld [vmem:[#allocation7 + $0x20] sm:$0xf]
    %v224 = vld [vmem:[#allocation7 + $0x24] sm:$0xf]
    %v225 = vld [vmem:[#allocation7 + $0x28] sm:$0xf]
    %v226 = vld [vmem:[#allocation7 + $0x2c] sm:$0xf]
    %v227 = vld [vmem:[#allocation7 + $0x30] sm:$0xf]
    %v228 = vld [vmem:[#allocation7 + $0x34] sm:$0xf]
    %v229 = vld [vmem:[#allocation7 + $0x38] sm:$0xf]
    %v230 = vld [vmem:[#allocation7 + $0x3c] sm:$0xf]
    %v231 = vld [vmem:[%s4] sm:$0x1]
    %v233 = vlaneseq
    %v234 = vshrl.u32 %v233, 7
    %v235 = vsub.s32 0, %v234
    %v236 = vrot.slane %v231, %v235
    %v254 = vunpack.c.l.b16 %v215
    %v255 = vunpack.c.l.b16 %v216
    %v256 = vunpack.c.l.b16 %v217
    %v257 = vunpack.c.l.b16 %v218
    %v258 = vunpack.c.l.b16 %v219
    %v259 = vunpack.c.l.b16 %v220
    %v260 = vunpack.c.l.b16 %v221
    %v261 = vunpack.c.l.b16 %v222
    %v262 = vunpack.c.l.b16 %v223
    %v263 = vunpack.c.l.b16 %v224
    %v264 = vunpack.c.l.b16 %v225
    %v265 = vunpack.c.l.b16 %v226
    %v266 = vunpack.c.l.b16 %v227
    %v267 = vunpack.c.l.b16 %v228
    %v268 = vunpack.c.l.b16 %v229
    %v269 = vunpack.c.l.b16 %v230
    %v270 = vpack.c.b16 %v255, %v254
    %v271 = vpack.c.b16 %v257, %v256
    %v272 = vpack.c.b16 %v259, %v258
    %v273 = vpack.c.b16 %v261, %v260
    %v274 = vpack.c.b16 %v263, %v262
    %v275 = vpack.c.b16 %v265, %v264
    %v276 = vpack.c.b16 %v267, %v266
    %v277 = vpack.c.b16 %v269, %v268
    %286 = vmatprep.subr.bf16.mxu0 0
    %287 = vmatpush1.bf16.msra.mxu0 %v270
    %288 = vmatprep.subr.bf16.mxu0 0
    %289 = vmatpush1.bf16.msra.mxu0 %v271
    %290 = vmatprep.subr.bf16.mxu0 0
    %291 = vmatpush1.bf16.msra.mxu0 %v272
    %292 = vmatprep.subr.bf16.mxu0 0
    %293 = vmatpush1.bf16.msra.mxu0 %v273
    %294 = vmatprep.subr.bf16.mxu0 0
    %295 = vmatpush1.bf16.msra.mxu0 %v274
    %296 = vmatprep.subr.bf16.mxu0 0
    %297 = vmatpush1.bf16.msra.mxu0 %v275
    %298 = vmatprep.subr.bf16.mxu0 0
    %299 = vmatpush1.bf16.msra.mxu0 %v276
    %300 = vmatprep.subr.bf16.mxu0 0
    %301 = vmatpush1.bf16.msra.mxu0 %v277
    %302 = vmatprep.subr.bf16.mxu0 0
    %303 = vmatpush1.bf16.msra.mxu0 0
    %304 = vmatprep.subr.bf16.mxu0 0
    %305 = vmatpush1.bf16.msra.mxu0 0
    %306 = vmatprep.subr.bf16.mxu0 0
    %307 = vmatpush1.bf16.msra.mxu0 0
    %308 = vmatprep.subr.bf16.mxu0 0
    %309 = vmatpush1.bf16.msra.mxu0 0
    %310 = vmatprep.subr.bf16.mxu0 0
    %311 = vmatpush1.bf16.msra.mxu0 0
    %312 = vmatprep.subr.bf16.mxu0 0
    %313 = vmatpush1.bf16.msra.mxu0 0
    %314 = vmatprep.subr.bf16.mxu0 0
    %315 = vmatpush1.bf16.msra.mxu0 0
    %316 = vmatprep.subr.bf16.mxu0 0
    %317 = vmatpush1.bf16.msra.mxu0 0
    %318 = vmatprep.mubr.bf16.mxu0 0
    %319 = vmatmul.mubr.bf16.gmra.mrb[0].mxu0 %v214
    %v320 = vpop.f32.mrb[0].mxu0
    %v321 = vadd.f32 %v236, %v320
    %v322 = vpop.f32.mrb[0].mxu0
    %v323 = vpop.f32.mrb[0].mxu0
    %v324 = vpop.f32.mrb[0].mxu0
    %325 = vdwg.mxu0
    %v326 = vmax.f32 %v321, 0.0
    %v327 = vpack.c.bf16 %v326, %v326
    %v328 = vld [vmem:[#allocation8] sm:$0xf]
    %v329 = vld [vmem:[#allocation8 + $0x4] sm:$0xf]
    %v330 = vld [vmem:[#allocation8 + $0x8] sm:$0xf]
    %v331 = vld [vmem:[#allocation8 + $0xc] sm:$0xf]
    %v332 = vld [vmem:[#allocation8 + $0x10] sm:$0xf]
    %v333 = vld [vmem:[#allocation8 + $0x14] sm:$0xf]
    %v334 = vld [vmem:[#allocation8 + $0x18] sm:$0xf]
    %v335 = vld [vmem:[#allocation8 + $0x1c] sm:$0xf]
    %v336 = vld [vmem:[#allocation8 + $0x20] sm:$0xf]
    %v337 = vld [vmem:[#allocation8 + $0x24] sm:$0xf]
    %v338 = vld [vmem:[#allocation8 + $0x28] sm:$0xf]
    %v339 = vld [vmem:[#allocation8 + $0x2c] sm:$0xf]
    %v340 = vld [vmem:[#allocation8 + $0x30] sm:$0xf]
    %v341 = vld [vmem:[#allocation8 + $0x34] sm:$0xf]
    %v342 = vld [vmem:[#allocation8 + $0x38] sm:$0xf]
    %v343 = vld [vmem:[#allocation8 + $0x3c] sm:$0xf]
    %v344 = vld [vmem:[%s6] sm:$0x1]
    %v346 = vlaneseq
    %v347 = vshrl.u32 %v346, 7
    %v348 = vsub.s32 0, %v347
    %v349 = vrot.slane %v344, %v348
    %v367 = vunpack.c.l.b16 %v328
    %v368 = vunpack.c.l.b16 %v329
    %v369 = vunpack.c.l.b16 %v330
    %v370 = vunpack.c.l.b16 %v331
    %v371 = vunpack.c.l.b16 %v332
    %v372 = vunpack.c.l.b16 %v333
    %v373 = vunpack.c.l.b16 %v334
    %v374 = vunpack.c.l.b16 %v335
    %v375 = vunpack.c.l.b16 %v336
    %v376 = vunpack.c.l.b16 %v337
    %v377 = vunpack.c.l.b16 %v338
    %v378 = vunpack.c.l.b16 %v339
    %v379 = vunpack.c.l.b16 %v340
    %v380 = vunpack.c.l.b16 %v341
    %v381 = vunpack.c.l.b16 %v342
    %v382 = vunpack.c.l.b16 %v343
    %v383 = vpack.c.b16 %v368, %v367
    %v384 = vpack.c.b16 %v370, %v369
    %v385 = vpack.c.b16 %v372, %v371
    %v386 = vpack.c.b16 %v374, %v373
    %v387 = vpack.c.b16 %v376, %v375
    %v388 = vpack.c.b16 %v378, %v377
    %v389 = vpack.c.b16 %v380, %v379
    %v390 = vpack.c.b16 %v382, %v381
    %399 = vmatprep.subr.bf16.mxu0 0
    %400 = vmatpush1.bf16.msra.mxu0 %v383
    %401 = vmatprep.subr.bf16.mxu0 0
    %402 = vmatpush1.bf16.msra.mxu0 %v384
    %403 = vmatprep.subr.bf16.mxu0 0
    %404 = vmatpush1.bf16.msra.mxu0 %v385
    %405 = vmatprep.subr.bf16.mxu0 0
    %406 = vmatpush1.bf16.msra.mxu0 %v386
    %407 = vmatprep.subr.bf16.mxu0 0
    %408 = vmatpush1.bf16.msra.mxu0 %v387
    %409 = vmatprep.subr.bf16.mxu0 0
    %410 = vmatpush1.bf16.msra.mxu0 %v388
    %411 = vmatprep.subr.bf16.mxu0 0
    %412 = vmatpush1.bf16.msra.mxu0 %v389
    %413 = vmatprep.subr.bf16.mxu0 0
    %414 = vmatpush1.bf16.msra.mxu0 %v390
    %415 = vmatprep.subr.bf16.mxu0 0
    %416 = vmatpush1.bf16.msra.mxu0 0
    %417 = vmatprep.subr.bf16.mxu0 0
    %418 = vmatpush1.bf16.msra.mxu0 0
    %419 = vmatprep.subr.bf16.mxu0 0
    %420 = vmatpush1.bf16.msra.mxu0 0
    %421 = vmatprep.subr.bf16.mxu0 0
    %422 = vmatpush1.bf16.msra.mxu0 0
    %423 = vmatprep.subr.bf16.mxu0 0
    %424 = vmatpush1.bf16.msra.mxu0 0
    %425 = vmatprep.subr.bf16.mxu0 0
    %426 = vmatpush1.bf16.msra.mxu0 0
    %427 = vmatprep.subr.bf16.mxu0 0
    %428 = vmatpush1.bf16.msra.mxu0 0
    %429 = vmatprep.subr.bf16.mxu0 0
    %430 = vmatpush1.bf16.msra.mxu0 0
    %431 = vmatprep.mubr.bf16.mxu0 0
    %432 = vmatmul.mubr.bf16.gmra.mrb[0].mxu0 %v327
    %v433 = vpop.f32.mrb[0].mxu0
    %v434 = vadd.f32 %v349, %v433
    %v435 = vpop.f32.mrb[0].mxu0
    %v436 = vpop.f32.mrb[0].mxu0
    %v437 = vpop.f32.mrb[0].mxu0
    %438 = vdwg.mxu0
    %v439 = vmax.f32 %v434, 0.0
    %v440 = vpack.c.bf16 %v439, %v439
    %v441 = vld [vmem:[#allocation10] sm:$0xf]
    %v442 = vld [vmem:[#allocation10 + $0x4] sm:$0xf]
    %v443 = vld [vmem:[#allocation10 + $0x8] sm:$0xf]
    %v444 = vld [vmem:[#allocation10 + $0xc] sm:$0xf]
    %v445 = vld [vmem:[#allocation10 + $0x10] sm:$0xf]
    %v446 = vld [vmem:[#allocation10 + $0x14] sm:$0xf]
    %v447 = vld [vmem:[#allocation10 + $0x18] sm:$0xf]
    %v448 = vld [vmem:[#allocation10 + $0x1c] sm:$0xf]
    %v449 = vld [vmem:[#allocation10 + $0x20] sm:$0xf]
    %v450 = vld [vmem:[#allocation10 + $0x24] sm:$0xf]
    %v451 = vld [vmem:[#allocation10 + $0x28] sm:$0xf]
    %v452 = vld [vmem:[#allocation10 + $0x2c] sm:$0xf]
    %v453 = vld [vmem:[#allocation10 + $0x30] sm:$0xf]
    %v454 = vld [vmem:[#allocation10 + $0x34] sm:$0xf]
    %v455 = vld [vmem:[#allocation10 + $0x38] sm:$0xf]
    %v456 = vld [vmem:[#allocation10 + $0x3c] sm:$0xf]
    %v457 = vld [vmem:[%s8] sm:$0x1]
    %v459 = vlaneseq
    %v460 = vshrl.u32 %v459, 7
    %v461 = vsub.s32 0, %v460
    %v462 = vrot.slane %v457, %v461
    %v480 = vunpack.c.l.b16 %v441
    %v481 = vunpack.c.l.b16 %v442
    %v482 = vunpack.c.l.b16 %v443
    %v483 = vunpack.c.l.b16 %v444
    %v484 = vunpack.c.l.b16 %v445
    %v485 = vunpack.c.l.b16 %v446
    %v486 = vunpack.c.l.b16 %v447
    %v487 = vunpack.c.l.b16 %v448
    %v488 = vunpack.c.l.b16 %v449
    %v489 = vunpack.c.l.b16 %v450
    %v490 = vunpack.c.l.b16 %v451
    %v491 = vunpack.c.l.b16 %v452
    %v492 = vunpack.c.l.b16 %v453
    %v493 = vunpack.c.l.b16 %v454
    %v494 = vunpack.c.l.b16 %v455
    %v495 = vunpack.c.l.b16 %v456
    %v496 = vpack.c.b16 %v481, %v480
    %v497 = vpack.c.b16 %v483, %v482
    %v498 = vpack.c.b16 %v485, %v484
    %v499 = vpack.c.b16 %v487, %v486
    %v500 = vpack.c.b16 %v489, %v488
    %v501 = vpack.c.b16 %v491, %v490
    %v502 = vpack.c.b16 %v493, %v492
    %v503 = vpack.c.b16 %v495, %v494
    %512 = vmatprep.subr.bf16.mxu0 0
    %513 = vmatpush1.bf16.msra.mxu0 %v496
    %514 = vmatprep.subr.bf16.mxu0 0
    %515 = vmatpush1.bf16.msra.mxu0 %v497
    %516 = vmatprep.subr.bf16.mxu0 0
    %517 = vmatpush1.bf16.msra.mxu0 %v498
    %518 = vmatprep.subr.bf16.mxu0 0
    %519 = vmatpush1.bf16.msra.mxu0 %v499
    %520 = vmatprep.subr.bf16.mxu0 0
    %521 = vmatpush1.bf16.msra.mxu0 %v500
    %522 = vmatprep.subr.bf16.mxu0 0
    %523 = vmatpush1.bf16.msra.mxu0 %v501
    %524 = vmatprep.subr.bf16.mxu0 0
    %525 = vmatpush1.bf16.msra.mxu0 %v502
    %526 = vmatprep.subr.bf16.mxu0 0
    %527 = vmatpush1.bf16.msra.mxu0 %v503
    %528 = vmatprep.subr.bf16.mxu0 0
    %529 = vmatpush1.bf16.msra.mxu0 0
    %530 = vmatprep.subr.bf16.mxu0 0
    %531 = vmatpush1.bf16.msra.mxu0 0
    %532 = vmatprep.subr.bf16.mxu0 0
    %533 = vmatpush1.bf16.msra.mxu0 0
    %534 = vmatprep.subr.bf16.mxu0 0
    %535 = vmatpush1.bf16.msra.mxu0 0
    %536 = vmatprep.subr.bf16.mxu0 0
    %537 = vmatpush1.bf16.msra.mxu0 0
    %538 = vmatprep.subr.bf16.mxu0 0
    %539 = vmatpush1.bf16.msra.mxu0 0
    %540 = vmatprep.subr.bf16.mxu0 0
    %541 = vmatpush1.bf16.msra.mxu0 0
    %542 = vmatprep.subr.bf16.mxu0 0
    %543 = vmatpush1.bf16.msra.mxu0 0
    %544 = vmatprep.mubr.bf16.mxu0 0
    %545 = vmatmul.mubr.bf16.gmra.mrb[0].mxu0 %v440
    %v546 = vpop.f32.mrb[0].mxu0
    %v547 = vadd.f32 %v462, %v546
    %v548 = vpop.f32.mrb[0].mxu0
    %v549 = vpop.f32.mrb[0].mxu0
    %v550 = vpop.f32.mrb[0].mxu0
    %551 = vdwg.mxu0
    %v552 = vmax.f32 %v547, 0.0
    %553 = vst [vmem:[#allocation11] sm:$0xff] %v552
    // Predicated region
    $region58: #{tpu_custom_call.1} parent=1 // pred_check
      _
    $region59: #{tpu_custom_call.1} parent=1 // pred_check_branch
      %555 = sbr.rel (0) target = $region61
    $region60: #{tpu_custom_call.1} parent=1 // pred_region
      %s557 = ssub.s32 128, 128
      %558 = vsyncadd [#allocation4], %s557
      %s560 = sshll.u32 [#allocation11], 4
      %s561 = int_to_ptr.vmem [resolvable:$true] %s560
      %563 = dma.vmem_to_hbm [thread:$0]  %s561, 128, %s9, [#allocation4]
    $region61: #{tpu_custom_call.1} parent=1 // pred_fallthru
      _
    // Predicated region
    $region62: #{tpu_custom_call.1} parent=1 // pred_check
      _
    $region63: #{tpu_custom_call.1} parent=1 // pred_check_branch
      %565 = sbr.rel (0) target = $region65
    $region64: #{tpu_custom_call.1} parent=1 // pred_region
      %566 = dma.done [#allocation4], 128
    $region65: #{tpu_custom_call.1} parent=1 // pred_fallthru
      _
    %567 = vsyncpa [#allocation3], 1
    %568 = vsyncpa [#allocation6], 1
    %569 = vsyncpa [#allocation9], 1
    %570 = vsyncpa [#allocation4], 1

</llo_original>
